<compile_context>
chip_gen: v7x
topology: tpu7x:2x2x1
jax: 0.10.0
libtpu: 0.0.40
codegen_flags: <defaults>
</compile_context>

<pallas_src>
import numpy as np
import jax
import jax.numpy as jnp
from jax import lax
from jax.experimental import pallas as pl
from jax.experimental.pallas import tpu as pltpu


# ----------------------------- kernel ---------------------------------------


def _hs_loss_kernel(g2_ref, cx_ref, sx_ref, w2t_ref, x_ref, y_ref, o_ref):
    ny = w2t_ref.shape[0]
    tb = x_ref.shape[0]
    c = x_ref.shape[1]

    x = x_ref[...]                                            # (TB, C, nx, ny) f32
    y = y_ref[...]

    # Stack [x - y | y] along the (leading, non-tiled, cheap) channel axis.
    s = jnp.concatenate([x - y, y], axis=1).astype(jnp.bfloat16)   # (TB, 2C, nx, ny)

    # ---- ny-stage DFT: one wide matmul against fused [cos | sin] ------------
    u = lax.dot_general(s, g2_ref[...], (((3,), (0,)), ((), ())),
                        preferred_element_type=jnp.float32)        # (TB, 2C, nx, 2ny)

    # Single minor-dims (XLU) transpose between the two 1-D DFT stages.
    ut = jnp.transpose(u, (0, 1, 3, 2)).astype(jnp.bfloat16)       # (TB, 2C, 2ny, nx)

    # ---- nx-stage DFT: two matmuls (cos / sin) ------------------------------
    vc = lax.dot_general(ut, cx_ref[...], (((3,), (0,)), ((), ())),
                         preferred_element_type=jnp.float32)       # (TB, 2C, 2ny, nx)
    vs = lax.dot_general(ut, sx_ref[...], (((3,), (0,)), ((), ())),
                         preferred_element_type=jnp.float32)       # (TB, 2C, 2ny, nx)

    w2t = w2t_ref[...]                                             # (ny, nx) f32

    def _weighted_sq_sum(vc_h, vs_h):
        # Real/imag recombination slices only the sublane axis (2ny -> ny).
        xre = vc_h[:, :, :ny, :] - vs_h[:, :, ny:, :]              # (TB, Ch, ny, nx)
        xim = vc_h[:, :, ny:, :] + vs_h[:, :, :ny, :]
        return jnp.sum((xre * xre + xim * xim) * w2t[None, None, :, :],
                       axis=(1, 2, 3))                             # (TB,)

    diff_sq = _weighted_sq_sum(vc[:, :c], vs[:, :c])               # channels 0..C-1 = diff
    y_sq = _weighted_sq_sum(vc[:, c:], vs[:, c:])                  # channels C..2C-1 = y
    ratio = jnp.sqrt(diff_sq) * lax.rsqrt(y_sq)                    # EUP rsqrt
    o_ref[...] = jnp.reshape(ratio, (1, 1, tb))


# ------------------------- host-side constants -------------------------------


def _dft_mats(n):
    idx = np.arange(n)
    ang = -2.0 * np.pi * np.outer(idx, idx) / n                    # symmetric
    return np.cos(ang).astype(np.float32), np.sin(ang).astype(np.float32)


def _sobolev_weight_sq(nx, ny, k, a):
    # Matches the torch construction (assumes even nx, ny).
    kx = np.abs(np.concatenate([np.arange(0, nx // 2), np.arange(-nx // 2, 0)])
                ).astype(np.float32)
    ky = np.abs(np.concatenate([np.arange(0, ny // 2), np.arange(-ny // 2, 0)])
                ).astype(np.float32)
    KX = np.tile(kx.reshape(nx, 1), (1, ny))
    KY = np.tile(ky.reshape(1, ny), (nx, 1))
    w2 = np.ones((nx, ny), np.float32)
    if k >= 1:
        w2 = w2 + (a[0] ** 2) * (KX ** 2 + KY ** 2)
    if k >= 2:
        w2 = w2 + (a[1] ** 2) * (KX ** 4 + 2.0 * KX ** 2 * KY ** 2 + KY ** 4)
    return w2.astype(np.float32)                                   # (nx, ny), [kx, ky]


def _vmem_capacity_bytes():
    try:
        info = pltpu.get_tpu_info()
        for name in ("vmem_capacity_bytes", "vmem_bytes", "vmem_size_bytes"):
            v = getattr(info, name, None)
            if v:
                return int(v)
    except Exception:
        pass
    return 64 * 1024 * 1024   # conservative (v7x per-TC)


def _const_spec(shape):
    """Whole-array constant operand, single-buffered when supported."""
    idx = lambda i: (0,) * len(shape)
    try:
        return pl.BlockSpec(shape, idx, pipeline_mode=pl.Buffered(1))
    except Exception:
        return pl.BlockSpec(shape, idx)


# ------------------------------ wrapper --------------------------------------


def hs_loss(x, y, k=1, a=None):
    """HsLoss forward (group=False, size_average=True, reduction=True, p=2)."""
    if a is None:
        a = [1] * k
    B, nx, ny = int(x.shape[0]), int(x.shape[1]), int(x.shape[2])
    assert nx % 2 == 0 and ny % 2 == 0, "even spatial dims (as in torch module)"

    # Channel-major layout: (B, C, nx, ny) so ny is the lane dim in-kernel.
    x4 = jnp.transpose(jnp.reshape(x, (B, nx, ny, -1)), (0, 3, 1, 2)).astype(jnp.float32)
    y4 = jnp.transpose(jnp.reshape(y, (B, nx, ny, -1)), (0, 3, 1, 2)).astype(jnp.float32)
    C = int(x4.shape[1])

    # ---- VMEM-budget-driven batch tile --------------------------------------
    vmem_cap = _vmem_capacity_bytes()
    vmem_limit = int(min(vmem_cap * 3 // 4, 112 * 1024 * 1024))
    # rough live bytes per batch element: dbl-buffered x/y (16) + s (4) +
    # u/ut f32+bf16 (40) + vc/vs (32) + re/im/mag half (12) ~= 104 * C*nx*ny.
    per_batch_bytes = 160 * C * nx * ny
    TB = max(1, min(B, (vmem_limit // 2) // per_batch_bytes))
    if B >= 2:
        TB = min(TB, (B + 1) // 2)    # keep NB >= 2: both v7x TensorCores busy
    NB = -(-B // TB)
    B_pad = NB * TB
    if B_pad != B:                    # edge-pad; padded ratios sliced off below
        reps = B_pad - B
        x4 = jnp.concatenate([x4, jnp.repeat(x4[-1:], reps, axis=0)], axis=0)
        y4 = jnp.concatenate([y4, jnp.repeat(y4[-1:], reps, axis=0)], axis=0)

    # ---- constants (bf16 DFT matrices, f32 squared Sobolev weight) ----------
    cy, sy = _dft_mats(ny)
    cx, sx = _dft_mats(nx)
    g2 = jnp.asarray(np.concatenate([cy, sy], axis=1), dtype=jnp.bfloat16)     # (ny, 2ny)
    cxj = jnp.asarray(cx, dtype=jnp.bfloat16)                                  # (nx, nx)
    sxj = jnp.asarray(sx, dtype=jnp.bfloat16)                                  # (nx, nx)
    w2t = jnp.asarray(np.ascontiguousarray(_sobolev_weight_sq(nx, ny, k, a).T),
                      dtype=jnp.float32)                                       # (ny, nx)

    flops = int(2 * B_pad * 2 * C * nx * ny * (2 * ny)          # ny stage
                + 2 * 2 * B_pad * 2 * C * (2 * ny) * nx * nx)   # nx stage (cos+sin)
    bytes_accessed = int(2 * B_pad * C * nx * ny * 4
                         + (ny * 2 * ny + 2 * nx * nx) * 2 + ny * nx * 4
                         + B_pad * 4)
    cost = pl.CostEstimate(flops=flops, transcendentals=int(2 * B_pad),
                           bytes_accessed=bytes_accessed)

    out = pl.pallas_call(
        _hs_loss_kernel,
        out_shape=jax.ShapeDtypeStruct((NB, 1, TB), jnp.float32),
        grid_spec=pltpu.PrefetchScalarGridSpec(
            num_scalar_prefetch=0,
            grid=(NB,),
            in_specs=[
                _const_spec((ny, 2 * ny)),                       # g2 = [cos_y | sin_y]
                _const_spec((nx, nx)),                           # cos_x
                _const_spec((nx, nx)),                           # sin_x
                _const_spec((ny, nx)),                           # squared weight (ky,kx)
                pl.BlockSpec((TB, C, nx, ny), lambda i: (i, 0, 0, 0)),
                pl.BlockSpec((TB, C, nx, ny), lambda i: (i, 0, 0, 0)),
            ],
            out_specs=pl.BlockSpec((1, 1, TB), lambda i: (i, 0, 0)),
        ),
        compiler_params=pltpu.CompilerParams(
            dimension_semantics=("parallel",),
            vmem_limit_bytes=vmem_limit),
        cost_estimate=cost,
    )(g2, cxj, sxj, w2t, x4, y4)

    ratios = out.reshape(-1)[:B]                                  # drop padded entries
    return jnp.mean(ratios)            # size_average=True, reduction=True


# ----------------------------- reference -------------------------------------


def _reference_hs_loss(x, y, k=1, a=None):
    """Pure-JAX reference (mirrors the torch code with jnp.fft)."""
    if a is None:
        a = [1] * k
    B, nx, ny = x.shape[0], x.shape[1], x.shape[2]
    x4 = jnp.reshape(x, (B, nx, ny, -1)).astype(jnp.float32)
    y4 = jnp.reshape(y, (B, nx, ny, -1)).astype(jnp.float32)
    w = jnp.sqrt(jnp.asarray(_sobolev_weight_sq(nx, ny, k, a)))[None, :, :, None]
    xf = jnp.fft.fftn(x4, axes=(1, 2)) * w
    yf = jnp.fft.fftn(y4, axes=(1, 2)) * w
    diff = jnp.sqrt(jnp.sum(jnp.abs(xf - yf) ** 2, axis=(1, 2, 3)))
    yn = jnp.sqrt(jnp.sum(jnp.abs(yf) ** 2, axis=(1, 2, 3)))
    return jnp.mean(diff / yn)


if __name__ == "__main__":
    key = jax.random.PRNGKey(0)
    kx_, ky_ = jax.random.split(key)
    B, NX, NY, C = 2, 16, 16, 4
    x = jax.random.normal(kx_, (B, NX, NY, C), dtype=jnp.float32)
    y = jax.random.normal(ky_, (B, NX, NY, C), dtype=jnp.float32)

    loss = jax.block_until_ready(hs_loss(x, y, k=1, a=[1]))
    ref = jax.block_until_ready(_reference_hs_loss(x, y, k=1, a=[1]))
    assert np.allclose(np.asarray(loss), np.asarray(ref), rtol=2e-2, atol=1e-3), (
        f"mismatch: kernel={float(loss)} ref={float(ref)}")
    print("KERNEL_OK")
</pallas_src>

<mosaic_0001>
module attributes {stable_mosaic.version = 11 : i64} {
  func.func @_hs_loss_kernel(%arg0: i32, %arg1: memref<16x32xbf16, #tpu.memory_space<vmem>>, %arg2: memref<16x16xbf16, #tpu.memory_space<vmem>>, %arg3: memref<16x16xbf16, #tpu.memory_space<vmem>>, %arg4: memref<16x16xf32, #tpu.memory_space<vmem>>, %arg5: memref<1x4x16x16xf32, #tpu.memory_space<vmem>>, %arg6: memref<1x4x16x16xf32, #tpu.memory_space<vmem>>, %arg7: memref<1x1x1xf32, #tpu.memory_space<vmem>>) attributes {dimension_semantics = [#tpu.dimension_semantics<parallel>], iteration_bounds = array<i64: 2>, scalar_prefetch = 0 : i64, scratch_operands = 0 : i64, tpu.core_type = #tpu.core_type<tc>, window_params = [{pipeline_mode = #tpu.pipeline_mode<synchronous>, transform_indices = @transform_0, window_bounds = array<i64: 16, 32>}, {pipeline_mode = #tpu.pipeline_mode<synchronous>, transform_indices = @transform_1, window_bounds = array<i64: 16, 16>}, {pipeline_mode = #tpu.pipeline_mode<synchronous>, transform_indices = @transform_2, window_bounds = array<i64: 16, 16>}, {pipeline_mode = #tpu.pipeline_mode<synchronous>, transform_indices = @transform_3, window_bounds = array<i64: 16, 16>}, {transform_indices = @transform_4, window_bounds = array<i64: 1, 4, 16, 16>}, {transform_indices = @transform_5, window_bounds = array<i64: 1, 4, 16, 16>}, {transform_indices = @transform_6, window_bounds = array<i64: 1, 1, 1>}]} {
    %c0 = arith.constant 0 : index
    %c0_0 = arith.constant 0 : index
    %c0_1 = arith.constant 0 : index
    %c0_2 = arith.constant 0 : index
    %0 = vector.load %arg5[%c0, %c0_0, %c0_1, %c0_2] : memref<1x4x16x16xf32, #tpu.memory_space<vmem>>, vector<1x4x16x16xf32>
    %c0_3 = arith.constant 0 : index
    %c0_4 = arith.constant 0 : index
    %c0_5 = arith.constant 0 : index
    %c0_6 = arith.constant 0 : index
    %1 = vector.load %arg6[%c0_3, %c0_4, %c0_5, %c0_6] : memref<1x4x16x16xf32, #tpu.memory_space<vmem>>, vector<1x4x16x16xf32>
    %2 = arith.subf %0, %1 : vector<1x4x16x16xf32>
    %3 = tpu.concatenate %2, %1 in 1 : vector<1x4x16x16xf32>, vector<1x4x16x16xf32> -> vector<1x8x16x16xf32>
    %4 = arith.truncf %3 : vector<1x8x16x16xf32> to vector<1x8x16x16xbf16>
    %c0_7 = arith.constant 0 : index
    %c0_8 = arith.constant 0 : index
    %5 = vector.load %arg1[%c0_7, %c0_8] : memref<16x32xbf16, #tpu.memory_space<vmem>>, vector<16x32xbf16>
    %cst = arith.constant dense<0.000000e+00> : vector<1x8x16x32xf32>
    %6 = tpu.matmul %4, %5, %cst {dimension_numbers = #tpu.dot_dimension_numbers<[3], [0], [0, 1, 2], [1], [0, 0, 0, 1, 0, 2, 1, 1], [], []>} : vector<1x8x16x16xbf16>, vector<16x32xbf16>, vector<1x8x16x32xf32> -> vector<1x8x16x32xf32>
    %7 = tpu.transpose %6, [0, 1, 3, 2] : vector<1x8x16x32xf32> -> vector<1x8x32x16xf32>
    %8 = arith.truncf %7 : vector<1x8x32x16xf32> to vector<1x8x32x16xbf16>
    %c0_9 = arith.constant 0 : index
    %c0_10 = arith.constant 0 : index
    %9 = vector.load %arg2[%c0_9, %c0_10] : memref<16x16xbf16, #tpu.memory_space<vmem>>, vector<16x16xbf16>
    %cst_11 = arith.constant dense<0.000000e+00> : vector<1x8x32x16xf32>
    %10 = tpu.matmul %8, %9, %cst_11 {dimension_numbers = #tpu.dot_dimension_numbers<[3], [0], [0, 1, 2], [1], [0, 0, 0, 1, 0, 2, 1, 1], [], []>} : vector<1x8x32x16xbf16>, vector<16x16xbf16>, vector<1x8x32x16xf32> -> vector<1x8x32x16xf32>
    %c0_12 = arith.constant 0 : index
    %c0_13 = arith.constant 0 : index
    %11 = vector.load %arg3[%c0_12, %c0_13] : memref<16x16xbf16, #tpu.memory_space<vmem>>, vector<16x16xbf16>
    %cst_14 = arith.constant dense<0.000000e+00> : vector<1x8x32x16xf32>
    %12 = tpu.matmul %8, %11, %cst_14 {dimension_numbers = #tpu.dot_dimension_numbers<[3], [0], [0, 1, 2], [1], [0, 0, 0, 1, 0, 2, 1, 1], [], []>} : vector<1x8x32x16xbf16>, vector<16x16xbf16>, vector<1x8x32x16xf32> -> vector<1x8x32x16xf32>
    %c0_15 = arith.constant 0 : index
    %c0_16 = arith.constant 0 : index
    %13 = vector.load %arg4[%c0_15, %c0_16] : memref<16x16xf32, #tpu.memory_space<vmem>>, vector<16x16xf32>
    %14 = vector.extract_strided_slice %10 {offsets = [0, 0, 0, 0], sizes = [1, 4, 32, 16], strides = [1, 1, 1, 1]} : vector<1x8x32x16xf32> to vector<1x4x32x16xf32>
    %15 = vector.extract_strided_slice %12 {offsets = [0, 0, 0, 0], sizes = [1, 4, 32, 16], strides = [1, 1, 1, 1]} : vector<1x8x32x16xf32> to vector<1x4x32x16xf32>
    %16 = vector.extract_strided_slice %14 {offsets = [0, 0, 0, 0], sizes = [1, 4, 16, 16], strides = [1, 1, 1, 1]} : vector<1x4x32x16xf32> to vector<1x4x16x16xf32>
    %17 = vector.extract_strided_slice %15 {offsets = [0, 0, 16, 0], sizes = [1, 4, 16, 16], strides = [1, 1, 1, 1]} : vector<1x4x32x16xf32> to vector<1x4x16x16xf32>
    %18 = arith.subf %16, %17 : vector<1x4x16x16xf32>
    %19 = vector.extract_strided_slice %14 {offsets = [0, 0, 16, 0], sizes = [1, 4, 16, 16], strides = [1, 1, 1, 1]} : vector<1x4x32x16xf32> to vector<1x4x16x16xf32>
    %20 = vector.extract_strided_slice %15 {offsets = [0, 0, 0, 0], sizes = [1, 4, 16, 16], strides = [1, 1, 1, 1]} : vector<1x4x32x16xf32> to vector<1x4x16x16xf32>
    %21 = arith.addf %19, %20 : vector<1x4x16x16xf32>
    %22 = arith.mulf %18, %18 : vector<1x4x16x16xf32>
    %23 = arith.mulf %21, %21 : vector<1x4x16x16xf32>
    %24 = arith.addf %22, %23 : vector<1x4x16x16xf32>
    %25 = vector.shape_cast %13 : vector<16x16xf32> to vector<1x1x16x16xf32>
    %26 = vector.broadcast %25 : vector<1x1x16x16xf32> to vector<1x4x16x16xf32>
    %27 = arith.mulf %24, %26 : vector<1x4x16x16xf32>
    %cst_17 = arith.constant dense<0.000000e+00> : vector<1xf32>
    %28 = vector.multi_reduction <add>, %27, %cst_17 [1, 2, 3] : vector<1x4x16x16xf32> to vector<1xf32>
    %29 = vector.extract_strided_slice %10 {offsets = [0, 4, 0, 0], sizes = [1, 4, 32, 16], strides = [1, 1, 1, 1]} : vector<1x8x32x16xf32> to vector<1x4x32x16xf32>
    %30 = vector.extract_strided_slice %12 {offsets = [0, 4, 0, 0], sizes = [1, 4, 32, 16], strides = [1, 1, 1, 1]} : vector<1x8x32x16xf32> to vector<1x4x32x16xf32>
    %31 = vector.extract_strided_slice %29 {offsets = [0, 0, 0, 0], sizes = [1, 4, 16, 16], strides = [1, 1, 1, 1]} : vector<1x4x32x16xf32> to vector<1x4x16x16xf32>
    %32 = vector.extract_strided_slice %30 {offsets = [0, 0, 16, 0], sizes = [1, 4, 16, 16], strides = [1, 1, 1, 1]} : vector<1x4x32x16xf32> to vector<1x4x16x16xf32>
    %33 = arith.subf %31, %32 : vector<1x4x16x16xf32>
    %34 = vector.extract_strided_slice %29 {offsets = [0, 0, 16, 0], sizes = [1, 4, 16, 16], strides = [1, 1, 1, 1]} : vector<1x4x32x16xf32> to vector<1x4x16x16xf32>
    %35 = vector.extract_strided_slice %30 {offsets = [0, 0, 0, 0], sizes = [1, 4, 16, 16], strides = [1, 1, 1, 1]} : vector<1x4x32x16xf32> to vector<1x4x16x16xf32>
    %36 = arith.addf %34, %35 : vector<1x4x16x16xf32>
    %37 = arith.mulf %33, %33 : vector<1x4x16x16xf32>
    %38 = arith.mulf %36, %36 : vector<1x4x16x16xf32>
    %39 = arith.addf %37, %38 : vector<1x4x16x16xf32>
    %40 = vector.shape_cast %13 : vector<16x16xf32> to vector<1x1x16x16xf32>
    %41 = vector.broadcast %40 : vector<1x1x16x16xf32> to vector<1x4x16x16xf32>
    %42 = arith.mulf %39, %41 : vector<1x4x16x16xf32>
    %cst_18 = arith.constant dense<0.000000e+00> : vector<1xf32>
    %43 = vector.multi_reduction <add>, %42, %cst_18 [1, 2, 3] : vector<1x4x16x16xf32> to vector<1xf32>
    %44 = math.sqrt %28 : vector<1xf32>
    %45 = math.rsqrt %43 : vector<1xf32>
    %46 = arith.mulf %44, %45 : vector<1xf32>
    %47 = vector.shape_cast %46 : vector<1xf32> to vector<1x1x1xf32>
    %c0_19 = arith.constant 0 : index
    %c0_20 = arith.constant 0 : index
    %c0_21 = arith.constant 0 : index
    %48 = vector.load %arg7[%c0_19, %c0_20, %c0_21] : memref<1x1x1xf32, #tpu.memory_space<vmem>>, vector<1x1x1xf32>
    tpu.vector_store %arg7[%c0_19, %c0_20, %c0_21], %47 {strides = array<i32>} : memref<1x1x1xf32, #tpu.memory_space<vmem>>, vector<1x1x1xf32>,
    return
  }
  func.func @transform_0(%arg0: i32) -> (i32, i32) {
    %c0_i32 = arith.constant 0 : i32
    %c0_i32_0 = arith.constant 0 : i32
    %c0_i32_1 = arith.constant 0 : i32
    return %c0_i32, %c0_i32_0 : i32, i32
  }
  func.func @transform_1(%arg0: i32) -> (i32, i32) {
    %c0_i32 = arith.constant 0 : i32
    %c0_i32_0 = arith.constant 0 : i32
    %c0_i32_1 = arith.constant 0 : i32
    return %c0_i32, %c0_i32_0 : i32, i32
  }
  func.func @transform_2(%arg0: i32) -> (i32, i32) {
    %c0_i32 = arith.constant 0 : i32
    %c0_i32_0 = arith.constant 0 : i32
    %c0_i32_1 = arith.constant 0 : i32
    return %c0_i32, %c0_i32_0 : i32, i32
  }
  func.func @transform_3(%arg0: i32) -> (i32, i32) {
    %c0_i32 = arith.constant 0 : i32
    %c0_i32_0 = arith.constant 0 : i32
    %c0_i32_1 = arith.constant 0 : i32
    return %c0_i32, %c0_i32_0 : i32, i32
  }
  func.func @transform_4(%arg0: i32) -> (i32, i32, i32, i32) {
    %c0_i32 = arith.constant 0 : i32
    %c0_i32_0 = arith.constant 0 : i32
    %c0_i32_1 = arith.constant 0 : i32
    %c0_i32_2 = arith.constant 0 : i32
    return %arg0, %c0_i32, %c0_i32_0, %c0_i32_1 : i32, i32, i32, i32
  }
  func.func @transform_5(%arg0: i32) -> (i32, i32, i32, i32) {
    %c0_i32 = arith.constant 0 : i32
    %c0_i32_0 = arith.constant 0 : i32
    %c0_i32_1 = arith.constant 0 : i32
    %c0_i32_2 = arith.constant 0 : i32
    return %arg0, %c0_i32, %c0_i32_0, %c0_i32_1 : i32, i32, i32, i32
  }
  func.func @transform_6(%arg0: i32) -> (i32, i32, i32) {
    %c0_i32 = arith.constant 0 : i32
    %c0_i32_0 = arith.constant 0 : i32
    %c0_i32_1 = arith.constant 0 : i32
    return %arg0, %c0_i32, %c0_i32_0 : i32, i32, i32
  }
}

</mosaic_0001>

<llo_original>
// kernel: tpu_custom_call.1
$region0: #{tpu_custom_call.1}
  #allocation0 [shape = 'u32[]', space=smem, size = 0x4, offset = 0x4, fixed_abs, tag = 'smem constant byte address 0x4 - core index']
  #allocation1 [shape = 'u32[144,128]{1,0:T(1,128)}', space=vmem, size = 0x12000, scoped, tag = 'internal scratch']
  %s0 = inlined_call_operand.hbm [shape: bf16[16,32], index: 0, kind: input, shape index: {}]
  %s1 = inlined_call_operand.hbm [shape: bf16[16,16], index: 1, kind: input, shape index: {}]
  %s2 = inlined_call_operand.hbm [shape: bf16[16,16], index: 2, kind: input, shape index: {}]
  %s3 = inlined_call_operand.hbm [shape: f32[16,16], index: 3, kind: input, shape index: {}]
  %s4 = inlined_call_operand.hbm [shape: f32[2,4,16,16], index: 4, kind: input, shape index: {}]
  %s5 = inlined_call_operand.hbm [shape: f32[2,4,16,16], index: 5, kind: input, shape index: {}]
  %s6 = inlined_call_operand.vmem [shape: f32[2,1,1], index: 6, kind: output, shape index: {}]
  %s7 = sld [smem:[#allocation0]]
  $region81: #{tpu_custom_call.1} parent=0
    _
  %s9 = ssub.s32 1, %s7
  %s10 = scalar_select 0, %s9, %s7
  $region1: #{tpu_custom_call.1} parent=0
    #allocation2 [shape = 'u8[4096]{0}', space=vmem, size = 0x1000, scoped, tag = 'input window, operand 0, single buffered']
    #allocation3 [shape = 's32[2]{0}', space=sflag, size = 0x8, scoped, tag = 'scoped memory for tpu_custom_call.1']
    #allocation4 [shape = 'u8[4096]{0}', space=vmem, size = 0x1000, scoped, tag = 'input window, operand 1, single buffered']
    #allocation5 [shape = 's32[1]{0}', space=sflag, size = 0x4, scoped, tag = 'scoped memory for tpu_custom_call.1']
    #allocation6 [shape = 'u8[4096]{0}', space=vmem, size = 0x1000, scoped, tag = 'input window, operand 2, single buffered']
    #allocation7 [shape = 'u8[8192]{0}', space=vmem, size = 0x2000, scoped, tag = 'input window, operand 3, single buffered']
    #allocation8 [shape = 's32[1]{0}', space=sflag, size = 0x4, scoped, tag = 'scoped memory for tpu_custom_call.1']
    #allocation9 [shape = 'u8[65536]{0}', space=vmem, size = 0x10000, scoped, tag = 'input window, operand 4']
    #allocation10 [shape = 'u8[65536]{0}', space=vmem, size = 0x10000, scoped, tag = 'input window, operand 5']
    %11 = vsyncpa [#allocation3], 0
    %12 = vsyncpa [#allocation5], 0
    %13 = vsyncpa [#allocation8], 0
    loop: start=0, step=1, limit=4
    $region2: #{tpu_custom_call.1} parent=1 // loop_pre_header
      _
    $region3: #{tpu_custom_call.1} parent=1 // loop_header
      %s15 = sphi 0, %s19
      %p16 = scmp.ge.s32.totalorder %s15, 4
      %s23 = sphi 0, %s23
      %s25 = sphi 0, %s23
      %s26 = sphi 0, %s25
      %s40 = sphi 0, %s26
      %s44 = sphi 0, %s44
      %s46 = sphi 0, %s44
      %s47 = sphi 0, %s46
      %s61 = sphi 0, %s47
      %s65 = sphi 0, %s65
      %s67 = sphi 0, %s65
      %s68 = sphi 0, %s67
      %s82 = sphi 0, %s68
      %s86 = sphi 0, %s86
      %s88 = sphi 0, %s86
      %s89 = sphi 0, %s88
      %s103 = sphi 0, %s89
      %s109 = sphi 0, %s111
      %s112 = sphi 0, %s109
      %s113 = sphi 0, %s112
      %s129 = sphi 0, %s113
      %s135 = sphi 0, %s137
      %s138 = sphi 0, %s135
      %s139 = sphi 0, %s138
      %s155 = sphi 0, %s139
      %s161 = sphi 0, %s163
      %s164 = sphi 0, %s161
      %s165 = sphi 0, %s164
      %s181 = sphi 0, %s165
    $region4: #{tpu_custom_call.1} parent=1 // loop_header_branch
      %18 = sbr.rel (%p16) target = $region8
    $region5: #{tpu_custom_call.1} parent=1 // loop_body
      %s20 = ssub.s32 %s15, 1
      %s21 = ssub.s32 %s15, 2
      %s22 = sadd.s32 %s15, 1
      %s24 = sadd.s32 %s23, 1
      %p27 = scmp.eq.s32.totalorder %s15, 1
      %p28 = scmp.ne.s32.totalorder %s23, %s25
      %p29 = scmp.eq.s32.totalorder %s15, 0
      %p30 = por %p28, %p29
      %p31 = scmp.ne.s32.totalorder %s23, %s25
      %p32 = scmp.eq.s32.totalorder %s20, 1
      %p33 = por %p31, %p32
      %p34 = scmp.ne.s32.totalorder %s25, %s26
      %p35 = scmp.eq.s32.totalorder %s20, 0
      %p36 = por %p34, %p35
      %p37 = scmp.ne.s32.totalorder %s25, %s26
      %p38 = scmp.eq.s32.totalorder %s21, 1
      %p39 = por %p37, %p38
      %p41 = scmp.ne.s32.totalorder %s26, %s40
      %p42 = scmp.eq.s32.totalorder %s21, 0
      %p43 = por %p41, %p42
      %s45 = sadd.s32 %s44, 1
      %p48 = scmp.eq.s32.totalorder %s15, 1
      %p49 = scmp.ne.s32.totalorder %s44, %s46
      %p50 = scmp.eq.s32.totalorder %s15, 0
      %p51 = por %p49, %p50
      %p52 = scmp.ne.s32.totalorder %s44, %s46
      %p53 = scmp.eq.s32.totalorder %s20, 1
      %p54 = por %p52, %p53
      %p55 = scmp.ne.s32.totalorder %s46, %s47
      %p56 = scmp.eq.s32.totalorder %s20, 0
      %p57 = por %p55, %p56
      %p58 = scmp.ne.s32.totalorder %s46, %s47
      %p59 = scmp.eq.s32.totalorder %s21, 1
      %p60 = por %p58, %p59
      %p62 = scmp.ne.s32.totalorder %s47, %s61
      %p63 = scmp.eq.s32.totalorder %s21, 0
      %p64 = por %p62, %p63
      %s66 = sadd.s32 %s65, 1
      %p69 = scmp.eq.s32.totalorder %s15, 1
      %p70 = scmp.ne.s32.totalorder %s65, %s67
      %p71 = scmp.eq.s32.totalorder %s15, 0
      %p72 = por %p70, %p71
      %p73 = scmp.ne.s32.totalorder %s65, %s67
      %p74 = scmp.eq.s32.totalorder %s20, 1
      %p75 = por %p73, %p74
      %p76 = scmp.ne.s32.totalorder %s67, %s68
      %p77 = scmp.eq.s32.totalorder %s20, 0
      %p78 = por %p76, %p77
      %p79 = scmp.ne.s32.totalorder %s67, %s68
      %p80 = scmp.eq.s32.totalorder %s21, 1
      %p81 = por %p79, %p80
      %p83 = scmp.ne.s32.totalorder %s68, %s82
      %p84 = scmp.eq.s32.totalorder %s21, 0
      %p85 = por %p83, %p84
      %s87 = sadd.s32 %s86, 1
      %p90 = scmp.eq.s32.totalorder %s15, 1
      %p91 = scmp.ne.s32.totalorder %s86, %s88
      %p92 = scmp.eq.s32.totalorder %s15, 0
      %p93 = por %p91, %p92
      %p94 = scmp.ne.s32.totalorder %s86, %s88
      %p95 = scmp.eq.s32.totalorder %s20, 1
      %p96 = por %p94, %p95
      %p97 = scmp.ne.s32.totalorder %s88, %s89
      %p98 = scmp.eq.s32.totalorder %s20, 0
      %p99 = por %p97, %p98
      %p100 = scmp.ne.s32.totalorder %s88, %s89
      %p101 = scmp.eq.s32.totalorder %s21, 1
      %p102 = por %p100, %p101
      %p104 = scmp.ne.s32.totalorder %s89, %s103
      %p105 = scmp.eq.s32.totalorder %s21, 0
      %p106 = por %p104, %p105
      %s107 = ssub.s32 %s15, %s22
      %p108 = scmp.eq.s32.totalorder %s107, 0
      %s110 = sadd.s32 %s109, 1
      %s111 = scalar_select %p108, %s109, %s110
      %p114 = pneg %p108
      %p115 = scmp.eq.s32.totalorder %s15, 1
      %p116 = por %p114, %p115
      %p117 = scmp.ne.s32.totalorder %s109, %s112
      %p118 = scmp.eq.s32.totalorder %s15, 0
      %p119 = por %p117, %p118
      %p120 = scmp.ne.s32.totalorder %s109, %s112
      %p121 = scmp.eq.s32.totalorder %s20, 1
      %p122 = por %p120, %p121
      %p123 = scmp.ne.s32.totalorder %s112, %s113
      %p124 = scmp.eq.s32.totalorder %s20, 0
      %p125 = por %p123, %p124
      %p126 = scmp.ne.s32.totalorder %s112, %s113
      %p127 = scmp.eq.s32.totalorder %s21, 1
      %p128 = por %p126, %p127
      %p130 = scmp.ne.s32.totalorder %s113, %s129
      %p131 = scmp.eq.s32.totalorder %s21, 0
      %p132 = por %p130, %p131
      %s133 = ssub.s32 %s15, %s22
      %p134 = scmp.eq.s32.totalorder %s133, 0
      %s136 = sadd.s32 %s135, 1
      %s137 = scalar_select %p134, %s135, %s136
      %p140 = pneg %p134
      %p141 = scmp.eq.s32.totalorder %s15, 1
      %p142 = por %p140, %p141
      %p143 = scmp.ne.s32.totalorder %s135, %s138
      %p144 = scmp.eq.s32.totalorder %s15, 0
      %p145 = por %p143, %p144
      %p146 = scmp.ne.s32.totalorder %s135, %s138
      %p147 = scmp.eq.s32.totalorder %s20, 1
      %p148 = por %p146, %p147
      %p149 = scmp.ne.s32.totalorder %s138, %s139
      %p150 = scmp.eq.s32.totalorder %s20, 0
      %p151 = por %p149, %p150
      %p152 = scmp.ne.s32.totalorder %s138, %s139
      %p153 = scmp.eq.s32.totalorder %s21, 1
      %p154 = por %p152, %p153
      %p156 = scmp.ne.s32.totalorder %s139, %s155
      %p157 = scmp.eq.s32.totalorder %s21, 0
      %p158 = por %p156, %p157
      %s159 = ssub.s32 %s15, %s22
      %p160 = scmp.eq.s32.totalorder %s159, 0
      %s162 = sadd.s32 %s161, 1
      %s163 = scalar_select %p160, %s161, %s162
      %p166 = pneg %p160
      %p167 = scmp.eq.s32.totalorder %s15, 1
      %p168 = por %p166, %p167
      %p169 = scmp.ne.s32.totalorder %s161, %s164
      %p170 = scmp.eq.s32.totalorder %s15, 0
      %p171 = por %p169, %p170
      %p172 = scmp.ne.s32.totalorder %s161, %s164
      %p173 = scmp.eq.s32.totalorder %s20, 1
      %p174 = por %p172, %p173
      %p175 = scmp.ne.s32.totalorder %s164, %s165
      %p176 = scmp.eq.s32.totalorder %s20, 0
      %p177 = por %p175, %p176
      %p178 = scmp.ne.s32.totalorder %s164, %s165
      %p179 = scmp.eq.s32.totalorder %s21, 1
      %p180 = por %p178, %p179
      %p182 = scmp.ne.s32.totalorder %s165, %s181
      %p183 = scmp.eq.s32.totalorder %s21, 0
      %p184 = por %p182, %p183
      %p185 = scmp.le.s32.totalorder 1, %s15
      %p186 = scmp.lt.s32.totalorder %s15, 3
      %p187 = pnand %p185, %p186
      %p188 = pneg %p187
      // Predicated region
      $region9: #{tpu_custom_call.1} parent=5 // pred_check
        _
      $region10: #{tpu_custom_call.1} parent=5 // pred_check_branch
        %190 = sbr.rel (%p187) target = $region12
      $region11: #{tpu_custom_call.1} parent=5 // pred_region
        %s191 = ssub.s32 %s15, 1
        // Predicated region
        $region13: #{tpu_custom_call.1} parent=11 // pred_check
          %p192 = pneg %p36
        $region14: #{tpu_custom_call.1} parent=11 // pred_check_branch
          %194 = sbr.rel (%p192) target = $region16
        $region15: #{tpu_custom_call.1} parent=11 // pred_region
          %s196 = ssub.s32 128, 128
          %197 = vsyncadd [#allocation3], %s196
          %s198 = sshll.u32 [#allocation2], 4
          %s199 = int_to_ptr.vmem [resolvable:$true] %s198
          %204 = dma.hbm_to_vmem [thread:$0]  %s0, 128, %s199, [#allocation3], 64, 64, 4
        $region16: #{tpu_custom_call.1} parent=11 // pred_fallthru
          _
        // Predicated region
        $region17: #{tpu_custom_call.1} parent=11 // pred_check
          %p205 = pneg %p57
        $region18: #{tpu_custom_call.1} parent=11 // pred_check_branch
          %207 = sbr.rel (%p205) target = $region20
        $region19: #{tpu_custom_call.1} parent=11 // pred_region
          %s209 = ssub.s32 128, 128
          %210 = vsyncadd [#allocation5], %s209
          %s211 = sshll.u32 [#allocation4], 4
          %s212 = int_to_ptr.vmem [resolvable:$true] %s211
          %217 = dma.hbm_to_vmem [thread:$0]  %s1, 128, %s212, [#allocation5], 64, 64, 4
        $region20: #{tpu_custom_call.1} parent=11 // pred_fallthru
          _
        // Predicated region
        $region21: #{tpu_custom_call.1} parent=11 // pred_check
          %p218 = pneg %p78
        $region22: #{tpu_custom_call.1} parent=11 // pred_check_branch
          %220 = sbr.rel (%p218) target = $region24
        $region23: #{tpu_custom_call.1} parent=11 // pred_region
          %s222 = ssub.s32 128, 128
          %223 = vsyncadd [#allocation5], %s222
          %s224 = sshll.u32 [#allocation6], 4
          %s225 = int_to_ptr.vmem [resolvable:$true] %s224
          %230 = dma.hbm_to_vmem [thread:$0]  %s2, 128, %s225, [#allocation5], 64, 64, 4
        $region24: #{tpu_custom_call.1} parent=11 // pred_fallthru
          _
        // Predicated region
        $region25: #{tpu_custom_call.1} parent=11 // pred_check
          %p231 = pneg %p99
        $region26: #{tpu_custom_call.1} parent=11 // pred_check_branch
          %233 = sbr.rel (%p231) target = $region28
        $region27: #{tpu_custom_call.1} parent=11 // pred_region
          %s235 = ssub.s32 256, 256
          %236 = vsyncadd [#allocation8], %s235
          %s237 = sshll.u32 [#allocation7], 4
          %s238 = int_to_ptr.vmem [resolvable:$true] %s237
          %243 = dma.hbm_to_vmem [thread:$0]  %s3, 256, %s238, [#allocation8], 128, 128, 8
        $region28: #{tpu_custom_call.1} parent=11 // pred_fallthru
          _
      $region12: #{tpu_custom_call.1} parent=5 // pred_fallthru
        _
      %p244 = scmp.lt.s32.totalorder %s15, 2
      // Predicated region
      $region29: #{tpu_custom_call.1} parent=5 // pred_check
        %p245 = pneg %p244
      $region30: #{tpu_custom_call.1} parent=5 // pred_check_branch
        %247 = sbr.rel (%p245) target = $region32
      $region31: #{tpu_custom_call.1} parent=5 // pred_region
        // Predicated region
        $region33: #{tpu_custom_call.1} parent=31 // pred_check
          %p248 = pneg %p119
        $region34: #{tpu_custom_call.1} parent=31 // pred_check_branch
          %250 = sbr.rel (%p248) target = $region36
        $region35: #{tpu_custom_call.1} parent=31 // pred_region
          %s251 = sand.u32 %s15, 1
          %s252 = scalar_lea.sflag [#allocation3], %s251
          %s253 = sand.u32 %s109, 1
          %s254 = smul.addr %s253, 64
          %s255 = scalar_lea.vmem [#allocation9], %s254
          %s257 = ssub.s32 1024, 1024
          %258 = vsyncadd %s252, %s257
          %s259 = smul.addr %s15, 8
          %s260 = smul.addr %s259, 128
          %s261 = scalar_lea.hbm %s4, %s260
          %s262 = sshll.u32 %s255, 4
          %s263 = int_to_ptr.vmem [resolvable:$true] %s262
          %268 = dma.hbm_to_vmem [thread:$0]  %s261, 1024, %s263, %s252, 128, 128, 8
        $region36: #{tpu_custom_call.1} parent=31 // pred_fallthru
          _
        // Predicated region
        $region37: #{tpu_custom_call.1} parent=31 // pred_check
          %p269 = pneg %p145
        $region38: #{tpu_custom_call.1} parent=31 // pred_check_branch
          %271 = sbr.rel (%p269) target = $region40
        $region39: #{tpu_custom_call.1} parent=31 // pred_region
          %s272 = sand.u32 %s15, 1
          %s273 = scalar_lea.sflag [#allocation3], %s272
          %s274 = sand.u32 %s135, 1
          %s275 = smul.addr %s274, 64
          %s276 = scalar_lea.vmem [#allocation10], %s275
          %s278 = ssub.s32 1024, 1024
          %279 = vsyncadd %s273, %s278
          %s280 = smul.addr %s15, 8
          %s281 = smul.addr %s280, 128
          %s282 = scalar_lea.hbm %s5, %s281
          %s283 = sshll.u32 %s276, 4
          %s284 = int_to_ptr.vmem [resolvable:$true] %s283
          %289 = dma.hbm_to_vmem [thread:$0]  %s282, 1024, %s284, %s273, 128, 128, 8
        $region40: #{tpu_custom_call.1} parent=31 // pred_fallthru
          _
      $region32: #{tpu_custom_call.1} parent=5 // pred_fallthru
        _
      %p290 = scmp.le.s32.totalorder 1, %s15
      %p291 = scmp.lt.s32.totalorder %s15, 3
      %p292 = pnand %p290, %p291
      %p293 = pneg %p292
      // Predicated region
      $region41: #{tpu_custom_call.1} parent=5 // pred_check
        _
      $region42: #{tpu_custom_call.1} parent=5 // pred_check_branch
        %295 = sbr.rel (%p292) target = $region44
      $region43: #{tpu_custom_call.1} parent=5 // pred_region
        %s296 = ssub.s32 %s15, 1
        // Predicated region
        $region45: #{tpu_custom_call.1} parent=43 // pred_check
          %p297 = pneg %p36
        $region46: #{tpu_custom_call.1} parent=43 // pred_check_branch
          %299 = sbr.rel (%p297) target = $region48
        $region47: #{tpu_custom_call.1} parent=43 // pred_region
          %300 = dma.done [#allocation3], 128
        $region48: #{tpu_custom_call.1} parent=43 // pred_fallthru
          _
        // Predicated region
        $region49: #{tpu_custom_call.1} parent=43 // pred_check
          %p301 = pneg %p57
        $region50: #{tpu_custom_call.1} parent=43 // pred_check_branch
          %303 = sbr.rel (%p301) target = $region52
        $region51: #{tpu_custom_call.1} parent=43 // pred_region
          %304 = dma.done [#allocation5], 128
        $region52: #{tpu_custom_call.1} parent=43 // pred_fallthru
          _
        // Predicated region
        $region53: #{tpu_custom_call.1} parent=43 // pred_check
          %p305 = pneg %p78
        $region54: #{tpu_custom_call.1} parent=43 // pred_check_branch
          %307 = sbr.rel (%p305) target = $region56
        $region55: #{tpu_custom_call.1} parent=43 // pred_region
          %308 = dma.done [#allocation5], 128
        $region56: #{tpu_custom_call.1} parent=43 // pred_fallthru
          _
        // Predicated region
        $region57: #{tpu_custom_call.1} parent=43 // pred_check
          %p309 = pneg %p99
        $region58: #{tpu_custom_call.1} parent=43 // pred_check_branch
          %311 = sbr.rel (%p309) target = $region60
        $region59: #{tpu_custom_call.1} parent=43 // pred_region
          %312 = dma.done [#allocation8], 256
        $region60: #{tpu_custom_call.1} parent=43 // pred_fallthru
          _
        %s313 = sand.u32 %s20, 1
        %s314 = scalar_lea.sflag [#allocation3], %s313
        %s315 = sand.u32 %s112, 1
        %s316 = smul.addr %s315, 64
        %s317 = scalar_lea.vmem [#allocation9], %s316
        // Predicated region
        $region61: #{tpu_custom_call.1} parent=43 // pred_check
          %p318 = pneg %p125
        $region62: #{tpu_custom_call.1} parent=43 // pred_check_branch
          %320 = sbr.rel (%p318) target = $region64
        $region63: #{tpu_custom_call.1} parent=43 // pred_region
          %321 = dma.done %s314, 1024
        $region64: #{tpu_custom_call.1} parent=43 // pred_fallthru
          _
        %s322 = sand.u32 %s20, 1
        %s323 = scalar_lea.sflag [#allocation3], %s322
        %s324 = sand.u32 %s138, 1
        %s325 = smul.addr %s324, 64
        %s326 = scalar_lea.vmem [#allocation10], %s325
        // Predicated region
        $region65: #{tpu_custom_call.1} parent=43 // pred_check
          %p327 = pneg %p151
        $region66: #{tpu_custom_call.1} parent=43 // pred_check_branch
          %329 = sbr.rel (%p327) target = $region68
        $region67: #{tpu_custom_call.1} parent=43 // pred_region
          %330 = dma.done %s323, 1024
        $region68: #{tpu_custom_call.1} parent=43 // pred_fallthru
          _
        %p331 = pneg %p36
        %p332 = pneg %p33
        %p333 = pneg %p57
        %p334 = pneg %p54
        %p335 = pneg %p78
        %p336 = pneg %p75
        %p337 = pneg %p99
        %p338 = pneg %p96
        %s339 = sand.u32 %s20, 1
        %s340 = scalar_lea.sflag [#allocation3], %s339
        %s341 = sand.u32 %s112, 1
        %s342 = smul.addr %s341, 64
        %s343 = scalar_lea.vmem [#allocation9], %s342
        %p344 = pneg %p125
        %p345 = pneg %p122
        %s346 = sand.u32 %s20, 1
        %s347 = scalar_lea.sflag [#allocation3], %s346
        %s348 = sand.u32 %s138, 1
        %s349 = smul.addr %s348, 64
        %s350 = scalar_lea.vmem [#allocation10], %s349
        %p351 = pneg %p151
        %p352 = pneg %p148
        %p353 = pneg %p177
        %p354 = pneg %p174
        %p355 = scmp.lt.s32.totalorder %s20, 1
        %s356 = scalar_select %p355, %s20, 1
        %s357 = scalar_lea.vmem %s6, %s356
        %p358 = scmp.lt.s32.totalorder %s20, 1
        %s359 = scalar_select %p358, %s20, 1
        %s360 = scalar_lea.vmem %s6, %s359
        %v362 = vld [vmem:[%s317] sm:$0xff]
        %v363 = vld [vmem:[%s317 + $0x8] sm:$0xff]
        %v364 = vld [vmem:[%s317 + $0x10] sm:$0xff]
        %v365 = vld [vmem:[%s317 + $0x18] sm:$0xff]
        %v366 = vld [vmem:[%s317 + $0x20] sm:$0xff]
        %v367 = vld [vmem:[%s317 + $0x28] sm:$0xff]
        %v368 = vld [vmem:[%s317 + $0x30] sm:$0xff]
        %v369 = vld [vmem:[%s317 + $0x38] sm:$0xff]
        %v370 = vld [vmem:[%s326] sm:$0xff]
        %v371 = vld [vmem:[%s326 + $0x8] sm:$0xff]
        %v372 = vld [vmem:[%s326 + $0x10] sm:$0xff]
        %v373 = vld [vmem:[%s326 + $0x18] sm:$0xff]
        %v374 = vld [vmem:[%s326 + $0x20] sm:$0xff]
        %v375 = vld [vmem:[%s326 + $0x28] sm:$0xff]
        %v376 = vld [vmem:[%s326 + $0x30] sm:$0xff]
        %v377 = vld [vmem:[%s326 + $0x38] sm:$0xff]
        %v378 = vsub.f32 %v362, %v370
        %v379 = vsub.f32 %v363, %v371
        %v380 = vsub.f32 %v364, %v372
        %v381 = vsub.f32 %v365, %v373
        %v382 = vsub.f32 %v366, %v374
        %v383 = vsub.f32 %v367, %v375
        %v384 = vsub.f32 %v368, %v376
        %v385 = vsub.f32 %v369, %v377
        %v386 = vpack.c.bf16 %v379, %v378
        %v387 = vpack.c.bf16 %v381, %v380
        %v388 = vpack.c.bf16 %v383, %v382
        %v389 = vpack.c.bf16 %v385, %v384
        %v390 = vpack.c.bf16 %v371, %v370
        %v391 = vpack.c.bf16 %v373, %v372
        %v392 = vpack.c.bf16 %v375, %v374
        %v393 = vpack.c.bf16 %v377, %v376
        %v394 = vld [vmem:[#allocation2] sm:$0xf]
        %v395 = vld [vmem:[#allocation2 + $0x4] sm:$0xf]
        %v398 = vunpack.c.l.b16 %v394
        %v399 = vunpack.c.l.b16 %v395
        %v400 = vpack.c.b16 %v399, %v398
        %vm402 = vcmask 130048
        %v404 = vsel %vm402, %v386, 0
        %v407 = vsel %vm402, %v387, 0
        %v410 = vsel %vm402, %v388, 0
        %v413 = vsel %vm402, %v389, 0
        %v416 = vsel %vm402, %v390, 0
        %v419 = vsel %vm402, %v391, 0
        %v422 = vsel %vm402, %v392, 0
        %v425 = vsel %vm402, %v393, 0
        %427 = vmatprep.subr.bf16.mxu0 0
        %428 = vmatpush1.bf16.msra.mxu0 %v400
        %429 = vmatprep.subr.bf16.mxu0 0
        %430 = vmatpush1.bf16.msra.mxu0 0
        %431 = vmatprep.subr.bf16.mxu0 0
        %432 = vmatpush1.bf16.msra.mxu0 0
        %433 = vmatprep.subr.bf16.mxu0 0
        %434 = vmatpush1.bf16.msra.mxu0 0
        %435 = vmatprep.subr.bf16.mxu0 0
        %436 = vmatpush1.bf16.msra.mxu0 0
        %437 = vmatprep.subr.bf16.mxu0 0
        %438 = vmatpush1.bf16.msra.mxu0 0
        %439 = vmatprep.subr.bf16.mxu0 0
        %440 = vmatpush1.bf16.msra.mxu0 0
        %441 = vmatprep.subr.bf16.mxu0 0
        %442 = vmatpush1.bf16.msra.mxu0 0
        %443 = vmatprep.subr.bf16.mxu0 0
        %444 = vmatpush1.bf16.msra.mxu0 0
        %445 = vmatprep.subr.bf16.mxu0 0
        %446 = vmatpush1.bf16.msra.mxu0 0
        %447 = vmatprep.subr.bf16.mxu0 0
        %448 = vmatpush1.bf16.msra.mxu0 0
        %449 = vmatprep.subr.bf16.mxu0 0
        %450 = vmatpush1.bf16.msra.mxu0 0
        %451 = vmatprep.subr.bf16.mxu0 0
        %452 = vmatpush1.bf16.msra.mxu0 0
        %453 = vmatprep.subr.bf16.mxu0 0
        %454 = vmatpush1.bf16.msra.mxu0 0
        %455 = vmatprep.subr.bf16.mxu0 0
        %456 = vmatpush1.bf16.msra.mxu0 0
        %457 = vmatprep.subr.bf16.mxu0 0
        %458 = vmatpush1.bf16.msra.mxu0 0
        %459 = vmatprep.mubr.bf16.mxu0 0
        %460 = vmatmul.mubr.bf16.gmra.mrb[0].mxu0 %v404
        %v461 = vpop.f32.mrb[0].mxu0
        %v462 = vadd.f32 0.0, %v461
        %v463 = vpop.f32.mrb[0].mxu0
        %v464 = vpop.f32.mrb[0].mxu0
        %v465 = vadd.f32 0.0, %v464
        %v466 = vpop.f32.mrb[0].mxu0
        %467 = vmatprep.mubr.bf16.mxu0 0
        %468 = vmatmul.mubr.bf16.gmra.mrb[0].mxu0 %v407
        %v469 = vpop.f32.mrb[0].mxu0
        %v470 = vadd.f32 0.0, %v469
        %v471 = vpop.f32.mrb[0].mxu0
        %v472 = vpop.f32.mrb[0].mxu0
        %v473 = vadd.f32 0.0, %v472
        %v474 = vpop.f32.mrb[0].mxu0
        %475 = vmatprep.mubr.bf16.mxu0 0
        %476 = vmatmul.mubr.bf16.gmra.mrb[0].mxu0 %v410
        %v477 = vpop.f32.mrb[0].mxu0
        %v478 = vadd.f32 0.0, %v477
        %v479 = vpop.f32.mrb[0].mxu0
        %v480 = vpop.f32.mrb[0].mxu0
        %v481 = vadd.f32 0.0, %v480
        %v482 = vpop.f32.mrb[0].mxu0
        %483 = vmatprep.mubr.bf16.mxu0 0
        %484 = vmatmul.mubr.bf16.gmra.mrb[0].mxu0 %v413
        %v485 = vpop.f32.mrb[0].mxu0
        %v486 = vadd.f32 0.0, %v485
        %v487 = vpop.f32.mrb[0].mxu0
        %v488 = vpop.f32.mrb[0].mxu0
        %v489 = vadd.f32 0.0, %v488
        %v490 = vpop.f32.mrb[0].mxu0
        %491 = vmatprep.mubr.bf16.mxu0 0
        %492 = vmatmul.mubr.bf16.gmra.mrb[0].mxu0 %v416
        %v493 = vpop.f32.mrb[0].mxu0
        %v494 = vadd.f32 0.0, %v493
        %v495 = vpop.f32.mrb[0].mxu0
        %v496 = vpop.f32.mrb[0].mxu0
        %v497 = vadd.f32 0.0, %v496
        %v498 = vpop.f32.mrb[0].mxu0
        %499 = vmatprep.mubr.bf16.mxu0 0
        %500 = vmatmul.mubr.bf16.gmra.mrb[0].mxu0 %v419
        %v501 = vpop.f32.mrb[0].mxu0
        %v502 = vadd.f32 0.0, %v501
        %v503 = vpop.f32.mrb[0].mxu0
        %v504 = vpop.f32.mrb[0].mxu0
        %v505 = vadd.f32 0.0, %v504
        %v506 = vpop.f32.mrb[0].mxu0
        %507 = vmatprep.mubr.bf16.mxu0 0
        %508 = vmatmul.mubr.bf16.gmra.mrb[0].mxu0 %v422
        %v509 = vpop.f32.mrb[0].mxu0
        %v510 = vadd.f32 0.0, %v509
        %v511 = vpop.f32.mrb[0].mxu0
        %v512 = vpop.f32.mrb[0].mxu0
        %v513 = vadd.f32 0.0, %v512
        %v514 = vpop.f32.mrb[0].mxu0
        %515 = vmatprep.mubr.bf16.mxu0 0
        %516 = vmatmul.mubr.bf16.gmra.mrb[0].mxu0 %v425
        %v517 = vpop.f32.mrb[0].mxu0
        %v518 = vadd.f32 0.0, %v517
        %v519 = vpop.f32.mrb[0].mxu0
        %v520 = vpop.f32.mrb[0].mxu0
        %v521 = vadd.f32 0.0, %v520
        %v522 = vpop.f32.mrb[0].mxu0
        %523 = vdwg.mxu0
        %524 = vxpose.xlu0.b32.start [1/16] %v462, 128
        %525 = vxpose.xlu0.b32.cont [2/16] %v465, 128
        %526 = vxpose.xlu0.b32.cont [3/16] 0.0, 128
        %527 = vxpose.xlu0.b32.cont [4/16] 0.0, 128
        %528 = vxpose.xlu0.b32.cont [5/16] 0.0, 128
        %529 = vxpose.xlu0.b32.cont [6/16] 0.0, 128
        %530 = vxpose.xlu0.b32.cont [7/16] 0.0, 128
        %531 = vxpose.xlu0.b32.cont [8/16] 0.0, 128
        %532 = vxpose.xlu0.b32.cont [9/16] 0.0, 128
        %533 = vxpose.xlu0.b32.cont [10/16] 0.0, 128
        %534 = vxpose.xlu0.b32.cont [11/16] 0.0, 128
        %535 = vxpose.xlu0.b32.cont [12/16] 0.0, 128
        %536 = vxpose.xlu0.b32.cont [13/16] 0.0, 128
        %537 = vxpose.xlu0.b32.cont [14/16] 0.0, 128
        %538 = vxpose.xlu0.b32.cont [15/16] 0.0, 128
        %539 = vxpose.xlu0.b32.end [16/16] 0.0, 128
        %v540 = vpop.trf.xlu0
        %v541 = vpop.trf.xlu0
        %v542 = vpop.trf.xlu0
        %v543 = vpop.trf.xlu0
        %v544 = vpop.trf.xlu0
        %v545 = vpop.trf.xlu0
        %v546 = vpop.trf.xlu0
        %v547 = vpop.trf.xlu0
        %v548 = vpop.trf.xlu0
        %v549 = vpop.trf.xlu0
        %v550 = vpop.trf.xlu0
        %v551 = vpop.trf.xlu0
        %v552 = vpop.trf.xlu0
        %v553 = vpop.trf.xlu0
        %v554 = vpop.trf.xlu0
        %v555 = vpop.trf.xlu0
        %556 = vxpose.xlu0.b32.start [1/16] %v470, 128
        %557 = vxpose.xlu0.b32.cont [2/16] %v473, 128
        %558 = vxpose.xlu0.b32.cont [3/16] 0.0, 128
        %559 = vxpose.xlu0.b32.cont [4/16] 0.0, 128
        %560 = vxpose.xlu0.b32.cont [5/16] 0.0, 128
        %561 = vxpose.xlu0.b32.cont [6/16] 0.0, 128
        %562 = vxpose.xlu0.b32.cont [7/16] 0.0, 128
        %563 = vxpose.xlu0.b32.cont [8/16] 0.0, 128
        %564 = vxpose.xlu0.b32.cont [9/16] 0.0, 128
        %565 = vxpose.xlu0.b32.cont [10/16] 0.0, 128
        %566 = vxpose.xlu0.b32.cont [11/16] 0.0, 128
        %567 = vxpose.xlu0.b32.cont [12/16] 0.0, 128
        %568 = vxpose.xlu0.b32.cont [13/16] 0.0, 128
        %569 = vxpose.xlu0.b32.cont [14/16] 0.0, 128
        %570 = vxpose.xlu0.b32.cont [15/16] 0.0, 128
        %571 = vxpose.xlu0.b32.end [16/16] 0.0, 128
        %v572 = vpop.trf.xlu0
        %v573 = vpop.trf.xlu0
        %v574 = vpop.trf.xlu0
        %v575 = vpop.trf.xlu0
        %v576 = vpop.trf.xlu0
        %v577 = vpop.trf.xlu0
        %v578 = vpop.trf.xlu0
        %v579 = vpop.trf.xlu0
        %v580 = vpop.trf.xlu0
        %v581 = vpop.trf.xlu0
        %v582 = vpop.trf.xlu0
        %v583 = vpop.trf.xlu0
        %v584 = vpop.trf.xlu0
        %v585 = vpop.trf.xlu0
        %v586 = vpop.trf.xlu0
        %v587 = vpop.trf.xlu0
        %588 = vxpose.xlu0.b32.start [1/16] %v478, 128
        %589 = vxpose.xlu0.b32.cont [2/16] %v481, 128
        %590 = vxpose.xlu0.b32.cont [3/16] 0.0, 128
        %591 = vxpose.xlu0.b32.cont [4/16] 0.0, 128
        %592 = vxpose.xlu0.b32.cont [5/16] 0.0, 128
        %593 = vxpose.xlu0.b32.cont [6/16] 0.0, 128
        %594 = vxpose.xlu0.b32.cont [7/16] 0.0, 128
        %595 = vxpose.xlu0.b32.cont [8/16] 0.0, 128
        %596 = vxpose.xlu0.b32.cont [9/16] 0.0, 128
        %597 = vxpose.xlu0.b32.cont [10/16] 0.0, 128
        %598 = vxpose.xlu0.b32.cont [11/16] 0.0, 128
        %599 = vxpose.xlu0.b32.cont [12/16] 0.0, 128
        %600 = vxpose.xlu0.b32.cont [13/16] 0.0, 128
        %601 = vxpose.xlu0.b32.cont [14/16] 0.0, 128
        %602 = vxpose.xlu0.b32.cont [15/16] 0.0, 128
        %603 = vxpose.xlu0.b32.end [16/16] 0.0, 128
        %v604 = vpop.trf.xlu0
        %v605 = vpop.trf.xlu0
        %v606 = vpop.trf.xlu0
        %v607 = vpop.trf.xlu0
        %v608 = vpop.trf.xlu0
        %v609 = vpop.trf.xlu0
        %v610 = vpop.trf.xlu0
        %v611 = vpop.trf.xlu0
        %v612 = vpop.trf.xlu0
        %v613 = vpop.trf.xlu0
        %v614 = vpop.trf.xlu0
        %v615 = vpop.trf.xlu0
        %v616 = vpop.trf.xlu0
        %v617 = vpop.trf.xlu0
        %v618 = vpop.trf.xlu0
        %v619 = vpop.trf.xlu0
        %620 = vxpose.xlu0.b32.start [1/16] %v486, 128
        %621 = vxpose.xlu0.b32.cont [2/16] %v489, 128
        %622 = vxpose.xlu0.b32.cont [3/16] 0.0, 128
        %623 = vxpose.xlu0.b32.cont [4/16] 0.0, 128
        %624 = vxpose.xlu0.b32.cont [5/16] 0.0, 128
        %625 = vxpose.xlu0.b32.cont [6/16] 0.0, 128
        %626 = vxpose.xlu0.b32.cont [7/16] 0.0, 128
        %627 = vxpose.xlu0.b32.cont [8/16] 0.0, 128
        %628 = vxpose.xlu0.b32.cont [9/16] 0.0, 128
        %629 = vxpose.xlu0.b32.cont [10/16] 0.0, 128
        %630 = vxpose.xlu0.b32.cont [11/16] 0.0, 128
        %631 = vxpose.xlu0.b32.cont [12/16] 0.0, 128
        %632 = vxpose.xlu0.b32.cont [13/16] 0.0, 128
        %633 = vxpose.xlu0.b32.cont [14/16] 0.0, 128
        %634 = vxpose.xlu0.b32.cont [15/16] 0.0, 128
        %635 = vxpose.xlu0.b32.end [16/16] 0.0, 128
        %v636 = vpop.trf.xlu0
        %v637 = vpop.trf.xlu0
        %v638 = vpop.trf.xlu0
        %v639 = vpop.trf.xlu0
        %v640 = vpop.trf.xlu0
        %v641 = vpop.trf.xlu0
        %v642 = vpop.trf.xlu0
        %v643 = vpop.trf.xlu0
        %v644 = vpop.trf.xlu0
        %v645 = vpop.trf.xlu0
        %v646 = vpop.trf.xlu0
        %v647 = vpop.trf.xlu0
        %v648 = vpop.trf.xlu0
        %v649 = vpop.trf.xlu0
        %v650 = vpop.trf.xlu0
        %v651 = vpop.trf.xlu0
        %652 = vxpose.xlu0.b32.start [1/16] %v494, 128
        %653 = vxpose.xlu0.b32.cont [2/16] %v497, 128
        %654 = vxpose.xlu0.b32.cont [3/16] 0.0, 128
        %655 = vxpose.xlu0.b32.cont [4/16] 0.0, 128
        %656 = vxpose.xlu0.b32.cont [5/16] 0.0, 128
        %657 = vxpose.xlu0.b32.cont [6/16] 0.0, 128
        %658 = vxpose.xlu0.b32.cont [7/16] 0.0, 128
        %659 = vxpose.xlu0.b32.cont [8/16] 0.0, 128
        %660 = vxpose.xlu0.b32.cont [9/16] 0.0, 128
        %661 = vxpose.xlu0.b32.cont [10/16] 0.0, 128
        %662 = vxpose.xlu0.b32.cont [11/16] 0.0, 128
        %663 = vxpose.xlu0.b32.cont [12/16] 0.0, 128
        %664 = vxpose.xlu0.b32.cont [13/16] 0.0, 128
        %665 = vxpose.xlu0.b32.cont [14/16] 0.0, 128
        %666 = vxpose.xlu0.b32.cont [15/16] 0.0, 128
        %667 = vxpose.xlu0.b32.end [16/16] 0.0, 128
        %v668 = vpop.trf.xlu0
        %v669 = vpop.trf.xlu0
        %v670 = vpop.trf.xlu0
        %v671 = vpop.trf.xlu0
        %v672 = vpop.trf.xlu0
        %v673 = vpop.trf.xlu0
        %v674 = vpop.trf.xlu0
        %v675 = vpop.trf.xlu0
        %v676 = vpop.trf.xlu0
        %v677 = vpop.trf.xlu0
        %v678 = vpop.trf.xlu0
        %v679 = vpop.trf.xlu0
        %v680 = vpop.trf.xlu0
        %v681 = vpop.trf.xlu0
        %v682 = vpop.trf.xlu0
        %v683 = vpop.trf.xlu0
        %684 = vxpose.xlu0.b32.start [1/16] %v502, 128
        %685 = vxpose.xlu0.b32.cont [2/16] %v505, 128
        %686 = vxpose.xlu0.b32.cont [3/16] 0.0, 128
        %687 = vxpose.xlu0.b32.cont [4/16] 0.0, 128
        %688 = vxpose.xlu0.b32.cont [5/16] 0.0, 128
        %689 = vxpose.xlu0.b32.cont [6/16] 0.0, 128
        %690 = vxpose.xlu0.b32.cont [7/16] 0.0, 128
        %691 = vxpose.xlu0.b32.cont [8/16] 0.0, 128
        %692 = vxpose.xlu0.b32.cont [9/16] 0.0, 128
        %693 = vxpose.xlu0.b32.cont [10/16] 0.0, 128
        %694 = vxpose.xlu0.b32.cont [11/16] 0.0, 128
        %695 = vxpose.xlu0.b32.cont [12/16] 0.0, 128
        %696 = vxpose.xlu0.b32.cont [13/16] 0.0, 128
        %697 = vxpose.xlu0.b32.cont [14/16] 0.0, 128
        %698 = vxpose.xlu0.b32.cont [15/16] 0.0, 128
        %699 = vxpose.xlu0.b32.end [16/16] 0.0, 128
        %v700 = vpop.trf.xlu0
        %v701 = vpop.trf.xlu0
        %v702 = vpop.trf.xlu0
        %v703 = vpop.trf.xlu0
        %v704 = vpop.trf.xlu0
        %v705 = vpop.trf.xlu0
        %v706 = vpop.trf.xlu0
        %v707 = vpop.trf.xlu0
        %v708 = vpop.trf.xlu0
        %v709 = vpop.trf.xlu0
        %v710 = vpop.trf.xlu0
        %v711 = vpop.trf.xlu0
        %v712 = vpop.trf.xlu0
        %v713 = vpop.trf.xlu0
        %v714 = vpop.trf.xlu0
        %v715 = vpop.trf.xlu0
        %716 = vxpose.xlu0.b32.start [1/16] %v510, 128
        %717 = vxpose.xlu0.b32.cont [2/16] %v513, 128
        %718 = vxpose.xlu0.b32.cont [3/16] 0.0, 128
        %719 = vxpose.xlu0.b32.cont [4/16] 0.0, 128
        %720 = vxpose.xlu0.b32.cont [5/16] 0.0, 128
        %721 = vxpose.xlu0.b32.cont [6/16] 0.0, 128
        %722 = vxpose.xlu0.b32.cont [7/16] 0.0, 128
        %723 = vxpose.xlu0.b32.cont [8/16] 0.0, 128
        %724 = vxpose.xlu0.b32.cont [9/16] 0.0, 128
        %725 = vxpose.xlu0.b32.cont [10/16] 0.0, 128
        %726 = vxpose.xlu0.b32.cont [11/16] 0.0, 128
        %727 = vxpose.xlu0.b32.cont [12/16] 0.0, 128
        %728 = vxpose.xlu0.b32.cont [13/16] 0.0, 128
        %729 = vxpose.xlu0.b32.cont [14/16] 0.0, 128
        %730 = vxpose.xlu0.b32.cont [15/16] 0.0, 128
        %731 = vxpose.xlu0.b32.end [16/16] 0.0, 128
        %v732 = vpop.trf.xlu0
        %v733 = vpop.trf.xlu0
        %v734 = vpop.trf.xlu0
        %v735 = vpop.trf.xlu0
        %v736 = vpop.trf.xlu0
        %v737 = vpop.trf.xlu0
        %v738 = vpop.trf.xlu0
        %v739 = vpop.trf.xlu0
        %v740 = vpop.trf.xlu0
        %v741 = vpop.trf.xlu0
        %v742 = vpop.trf.xlu0
        %v743 = vpop.trf.xlu0
        %v744 = vpop.trf.xlu0
        %v745 = vpop.trf.xlu0
        %v746 = vpop.trf.xlu0
        %v747 = vpop.trf.xlu0
        %748 = vxpose.xlu0.b32.start [1/16] %v518, 128
        %749 = vxpose.xlu0.b32.cont [2/16] %v521, 128
        %750 = vxpose.xlu0.b32.cont [3/16] 0.0, 128
        %751 = vxpose.xlu0.b32.cont [4/16] 0.0, 128
        %752 = vxpose.xlu0.b32.cont [5/16] 0.0, 128
        %753 = vxpose.xlu0.b32.cont [6/16] 0.0, 128
        %754 = vxpose.xlu0.b32.cont [7/16] 0.0, 128
        %755 = vxpose.xlu0.b32.cont [8/16] 0.0, 128
        %756 = vxpose.xlu0.b32.cont [9/16] 0.0, 128
        %757 = vxpose.xlu0.b32.cont [10/16] 0.0, 128
        %758 = vxpose.xlu0.b32.cont [11/16] 0.0, 128
        %759 = vxpose.xlu0.b32.cont [12/16] 0.0, 128
        %760 = vxpose.xlu0.b32.cont [13/16] 0.0, 128
        %761 = vxpose.xlu0.b32.cont [14/16] 0.0, 128
        %762 = vxpose.xlu0.b32.cont [15/16] 0.0, 128
        %763 = vxpose.xlu0.b32.end [16/16] 0.0, 128
        %v764 = vpop.trf.xlu0
        %v765 = vpop.trf.xlu0
        %v766 = vpop.trf.xlu0
        %v767 = vpop.trf.xlu0
        %v768 = vpop.trf.xlu0
        %v769 = vpop.trf.xlu0
        %v770 = vpop.trf.xlu0
        %v771 = vpop.trf.xlu0
        %v772 = vpop.trf.xlu0
        %v773 = vpop.trf.xlu0
        %v774 = vpop.trf.xlu0
        %v775 = vpop.trf.xlu0
        %v776 = vpop.trf.xlu0
        %v777 = vpop.trf.xlu0
        %v778 = vpop.trf.xlu0
        %v779 = vpop.trf.xlu0
        %v780 = vpack.c.bf16 %v541, %v540
        %v781 = vpack.c.bf16 %v543, %v542
        %v782 = vpack.c.bf16 %v573, %v572
        %v783 = vpack.c.bf16 %v575, %v574
        %v784 = vpack.c.bf16 %v605, %v604
        %v785 = vpack.c.bf16 %v607, %v606
        %v786 = vpack.c.bf16 %v637, %v636
        %v787 = vpack.c.bf16 %v639, %v638
        %v788 = vpack.c.bf16 %v669, %v668
        %v789 = vpack.c.bf16 %v671, %v670
        %v790 = vpack.c.bf16 %v701, %v700
        %v791 = vpack.c.bf16 %v703, %v702
        %v792 = vpack.c.bf16 %v733, %v732
        %v793 = vpack.c.bf16 %v735, %v734
        %v794 = vpack.c.bf16 %v765, %v764
        %v795 = vpack.c.bf16 %v767, %v766
        %v796 = vld [vmem:[#allocation4] sm:$0xf]
        %v797 = vld [vmem:[#allocation4 + $0x4] sm:$0xf]
        %v800 = vunpack.c.l.b16 %v796
        %v801 = vunpack.c.l.b16 %v797
        %v802 = vpack.c.b16 %v801, %v800
        %v805 = vsel %vm402, %v780, 0
        %v808 = vsel %vm402, %v781, 0
        %v811 = vsel %vm402, %v782, 0
        %v814 = vsel %vm402, %v783, 0
        %v817 = vsel %vm402, %v784, 0
        %v820 = vsel %vm402, %v785, 0
        %v823 = vsel %vm402, %v786, 0
        %v826 = vsel %vm402, %v787, 0
        %v829 = vsel %vm402, %v788, 0
        %v832 = vsel %vm402, %v789, 0
        %v835 = vsel %vm402, %v790, 0
        %v838 = vsel %vm402, %v791, 0
        %v841 = vsel %vm402, %v792, 0
        %v844 = vsel %vm402, %v793, 0
        %v847 = vsel %vm402, %v794, 0
        %v850 = vsel %vm402, %v795, 0
        %852 = vmatprep.subr.bf16.mxu0 0
        %853 = vmatpush1.bf16.msra.mxu0 %v802
        %854 = vmatprep.subr.bf16.mxu0 0
        %855 = vmatpush1.bf16.msra.mxu0 0
        %856 = vmatprep.subr.bf16.mxu0 0
        %857 = vmatpush1.bf16.msra.mxu0 0
        %858 = vmatprep.subr.bf16.mxu0 0
        %859 = vmatpush1.bf16.msra.mxu0 0
        %860 = vmatprep.subr.bf16.mxu0 0
        %861 = vmatpush1.bf16.msra.mxu0 0
        %862 = vmatprep.subr.bf16.mxu0 0
        %863 = vmatpush1.bf16.msra.mxu0 0
        %864 = vmatprep.subr.bf16.mxu0 0
        %865 = vmatpush1.bf16.msra.mxu0 0
        %866 = vmatprep.subr.bf16.mxu0 0
        %867 = vmatpush1.bf16.msra.mxu0 0
        %868 = vmatprep.subr.bf16.mxu0 0
        %869 = vmatpush1.bf16.msra.mxu0 0
        %870 = vmatprep.subr.bf16.mxu0 0
        %871 = vmatpush1.bf16.msra.mxu0 0
        %872 = vmatprep.subr.bf16.mxu0 0
        %873 = vmatpush1.bf16.msra.mxu0 0
        %874 = vmatprep.subr.bf16.mxu0 0
        %875 = vmatpush1.bf16.msra.mxu0 0
        %876 = vmatprep.subr.bf16.mxu0 0
        %877 = vmatpush1.bf16.msra.mxu0 0
        %878 = vmatprep.subr.bf16.mxu0 0
        %879 = vmatpush1.bf16.msra.mxu0 0
        %880 = vmatprep.subr.bf16.mxu0 0
        %881 = vmatpush1.bf16.msra.mxu0 0
        %882 = vmatprep.subr.bf16.mxu0 0
        %883 = vmatpush1.bf16.msra.mxu0 0
        %884 = vmatprep.mubr.bf16.mxu0 0
        %885 = vmatmul.mubr.bf16.gmra.mrb[0].mxu0 %v805
        %v886 = vpop.f32.mrb[0].mxu0
        %v887 = vadd.f32 0.0, %v886
        %v888 = vpop.f32.mrb[0].mxu0
        %v889 = vpop.f32.mrb[0].mxu0
        %v890 = vadd.f32 0.0, %v889
        %v891 = vpop.f32.mrb[0].mxu0
        %892 = vmatprep.mubr.bf16.mxu0 0
        %893 = vmatmul.mubr.bf16.gmra.mrb[0].mxu0 %v808
        %v894 = vpop.f32.mrb[0].mxu0
        %v895 = vadd.f32 0.0, %v894
        %v896 = vpop.f32.mrb[0].mxu0
        %v897 = vpop.f32.mrb[0].mxu0
        %v898 = vadd.f32 0.0, %v897
        %v899 = vpop.f32.mrb[0].mxu0
        %900 = vmatprep.mubr.bf16.mxu0 0
        %901 = vmatmul.mubr.bf16.gmra.mrb[0].mxu0 %v811
        %v902 = vpop.f32.mrb[0].mxu0
        %v903 = vadd.f32 0.0, %v902
        %v904 = vpop.f32.mrb[0].mxu0
        %v905 = vpop.f32.mrb[0].mxu0
        %v906 = vadd.f32 0.0, %v905
        %v907 = vpop.f32.mrb[0].mxu0
        %908 = vmatprep.mubr.bf16.mxu0 0
        %909 = vmatmul.mubr.bf16.gmra.mrb[0].mxu0 %v814
        %v910 = vpop.f32.mrb[0].mxu0
        %v911 = vadd.f32 0.0, %v910
        %v912 = vpop.f32.mrb[0].mxu0
        %v913 = vpop.f32.mrb[0].mxu0
        %v914 = vadd.f32 0.0, %v913
        %v915 = vpop.f32.mrb[0].mxu0
        %916 = vmatprep.mubr.bf16.mxu0 0
        %917 = vmatmul.mubr.bf16.gmra.mrb[0].mxu0 %v817
        %v918 = vpop.f32.mrb[0].mxu0
        %v919 = vadd.f32 0.0, %v918
        %v920 = vpop.f32.mrb[0].mxu0
        %v921 = vpop.f32.mrb[0].mxu0
        %v922 = vadd.f32 0.0, %v921
        %v923 = vpop.f32.mrb[0].mxu0
        %924 = vmatprep.mubr.bf16.mxu0 0
        %925 = vmatmul.mubr.bf16.gmra.mrb[0].mxu0 %v820
        %v926 = vpop.f32.mrb[0].mxu0
        %v927 = vadd.f32 0.0, %v926
        %v928 = vpop.f32.mrb[0].mxu0
        %v929 = vpop.f32.mrb[0].mxu0
        %v930 = vadd.f32 0.0, %v929
        %v931 = vpop.f32.mrb[0].mxu0
        %932 = vmatprep.mubr.bf16.mxu0 0
        %933 = vmatmul.mubr.bf16.gmra.mrb[0].mxu0 %v823
        %v934 = vpop.f32.mrb[0].mxu0
        %v935 = vadd.f32 0.0, %v934
        %v936 = vpop.f32.mrb[0].mxu0
        %v937 = vpop.f32.mrb[0].mxu0
        %v938 = vadd.f32 0.0, %v937
        %v939 = vpop.f32.mrb[0].mxu0
        %940 = vmatprep.mubr.bf16.mxu0 0
        %941 = vmatmul.mubr.bf16.gmra.mrb[0].mxu0 %v826
        %v942 = vpop.f32.mrb[0].mxu0
        %v943 = vadd.f32 0.0, %v942
        %v944 = vpop.f32.mrb[0].mxu0
        %v945 = vpop.f32.mrb[0].mxu0
        %v946 = vadd.f32 0.0, %v945
        %v947 = vpop.f32.mrb[0].mxu0
        %948 = vmatprep.mubr.bf16.mxu0 0
        %949 = vmatmul.mubr.bf16.gmra.mrb[0].mxu0 %v829
        %v950 = vpop.f32.mrb[0].mxu0
        %v951 = vadd.f32 0.0, %v950
        %v952 = vpop.f32.mrb[0].mxu0
        %v953 = vpop.f32.mrb[0].mxu0
        %v954 = vadd.f32 0.0, %v953
        %v955 = vpop.f32.mrb[0].mxu0
        %956 = vmatprep.mubr.bf16.mxu0 0
        %957 = vmatmul.mubr.bf16.gmra.mrb[0].mxu0 %v832
        %v958 = vpop.f32.mrb[0].mxu0
        %v959 = vadd.f32 0.0, %v958
        %v960 = vpop.f32.mrb[0].mxu0
        %v961 = vpop.f32.mrb[0].mxu0
        %v962 = vadd.f32 0.0, %v961
        %v963 = vpop.f32.mrb[0].mxu0
        %964 = vmatprep.mubr.bf16.mxu0 0
        %965 = vmatmul.mubr.bf16.gmra.mrb[0].mxu0 %v835
        %v966 = vpop.f32.mrb[0].mxu0
        %v967 = vadd.f32 0.0, %v966
        %v968 = vpop.f32.mrb[0].mxu0
        %v969 = vpop.f32.mrb[0].mxu0
        %v970 = vadd.f32 0.0, %v969
        %v971 = vpop.f32.mrb[0].mxu0
        %972 = vmatprep.mubr.bf16.mxu0 0
        %973 = vmatmul.mubr.bf16.gmra.mrb[0].mxu0 %v838
        %v974 = vpop.f32.mrb[0].mxu0
        %v975 = vadd.f32 0.0, %v974
        %v976 = vpop.f32.mrb[0].mxu0
        %v977 = vpop.f32.mrb[0].mxu0
        %v978 = vadd.f32 0.0, %v977
        %v979 = vpop.f32.mrb[0].mxu0
        %980 = vmatprep.mubr.bf16.mxu0 0
        %981 = vmatmul.mubr.bf16.gmra.mrb[0].mxu0 %v841
        %v982 = vpop.f32.mrb[0].mxu0
        %v983 = vadd.f32 0.0, %v982
        %v984 = vpop.f32.mrb[0].mxu0
        %v985 = vpop.f32.mrb[0].mxu0
        %v986 = vadd.f32 0.0, %v985
        %v987 = vpop.f32.mrb[0].mxu0
        %988 = vmatprep.mubr.bf16.mxu0 0
        %989 = vmatmul.mubr.bf16.gmra.mrb[0].mxu0 %v844
        %v990 = vpop.f32.mrb[0].mxu0
        %v991 = vadd.f32 0.0, %v990
        %v992 = vpop.f32.mrb[0].mxu0
        %v993 = vpop.f32.mrb[0].mxu0
        %v994 = vadd.f32 0.0, %v993
        %v995 = vpop.f32.mrb[0].mxu0
        %996 = vmatprep.mubr.bf16.mxu0 0
        %997 = vmatmul.mubr.bf16.gmra.mrb[0].mxu0 %v847
        %v998 = vpop.f32.mrb[0].mxu0
        %v999 = vadd.f32 0.0, %v998
        %v1000 = vpop.f32.mrb[0].mxu0
        %v1001 = vpop.f32.mrb[0].mxu0
        %v1002 = vadd.f32 0.0, %v1001
        %v1003 = vpop.f32.mrb[0].mxu0
        %1004 = vmatprep.mubr.bf16.mxu0 0
        %1005 = vmatmul.mubr.bf16.gmra.mrb[0].mxu0 %v850
        %v1006 = vpop.f32.mrb[0].mxu0
        %v1007 = vadd.f32 0.0, %v1006
        %v1008 = vpop.f32.mrb[0].mxu0
        %v1009 = vpop.f32.mrb[0].mxu0
        %v1010 = vadd.f32 0.0, %v1009
        %v1011 = vpop.f32.mrb[0].mxu0
        %1012 = vdwg.mxu0
        %v1013 = vld [vmem:[#allocation6] sm:$0xf]
        %v1014 = vld [vmem:[#allocation6 + $0x4] sm:$0xf]
        %v1017 = vunpack.c.l.b16 %v1013
        %v1018 = vunpack.c.l.b16 %v1014
        %v1019 = vpack.c.b16 %v1018, %v1017
        %1021 = vmatprep.subr.bf16.mxu0 0
        %1022 = vmatpush1.bf16.msra.mxu0 %v1019
        %1023 = vmatprep.subr.bf16.mxu0 0
        %1024 = vmatpush1.bf16.msra.mxu0 0
        %1025 = vmatprep.subr.bf16.mxu0 0
        %1026 = vmatpush1.bf16.msra.mxu0 0
        %1027 = vmatprep.subr.bf16.mxu0 0
        %1028 = vmatpush1.bf16.msra.mxu0 0
        %1029 = vmatprep.subr.bf16.mxu0 0
        %1030 = vmatpush1.bf16.msra.mxu0 0
        %1031 = vmatprep.subr.bf16.mxu0 0
        %1032 = vmatpush1.bf16.msra.mxu0 0
        %1033 = vmatprep.subr.bf16.mxu0 0
        %1034 = vmatpush1.bf16.msra.mxu0 0
        %1035 = vmatprep.subr.bf16.mxu0 0
        %1036 = vmatpush1.bf16.msra.mxu0 0
        %1037 = vmatprep.subr.bf16.mxu0 0
        %1038 = vmatpush1.bf16.msra.mxu0 0
        %1039 = vmatprep.subr.bf16.mxu0 0
        %1040 = vmatpush1.bf16.msra.mxu0 0
        %1041 = vmatprep.subr.bf16.mxu0 0
        %1042 = vmatpush1.bf16.msra.mxu0 0
        %1043 = vmatprep.subr.bf16.mxu0 0
        %1044 = vmatpush1.bf16.msra.mxu0 0
        %1045 = vmatprep.subr.bf16.mxu0 0
        %1046 = vmatpush1.bf16.msra.mxu0 0
        %1047 = vmatprep.subr.bf16.mxu0 0
        %1048 = vmatpush1.bf16.msra.mxu0 0
        %1049 = vmatprep.subr.bf16.mxu0 0
        %1050 = vmatpush1.bf16.msra.mxu0 0
        %1051 = vmatprep.subr.bf16.mxu0 0
        %1052 = vmatpush1.bf16.msra.mxu0 0
        %1053 = vmatprep.mubr.bf16.mxu0 0
        %1054 = vmatmul.mubr.bf16.gmra.mrb[0].mxu0 %v805
        %v1055 = vpop.f32.mrb[0].mxu0
        %v1056 = vadd.f32 0.0, %v1055
        %v1057 = vpop.f32.mrb[0].mxu0
        %v1058 = vpop.f32.mrb[0].mxu0
        %v1059 = vadd.f32 0.0, %v1058
        %v1060 = vpop.f32.mrb[0].mxu0
        %1061 = vmatprep.mubr.bf16.mxu0 0
        %1062 = vmatmul.mubr.bf16.gmra.mrb[0].mxu0 %v808
        %v1063 = vpop.f32.mrb[0].mxu0
        %v1064 = vadd.f32 0.0, %v1063
        %v1065 = vpop.f32.mrb[0].mxu0
        %v1066 = vpop.f32.mrb[0].mxu0
        %v1067 = vadd.f32 0.0, %v1066
        %v1068 = vpop.f32.mrb[0].mxu0
        %1069 = vmatprep.mubr.bf16.mxu0 0
        %1070 = vmatmul.mubr.bf16.gmra.mrb[0].mxu0 %v811
        %v1071 = vpop.f32.mrb[0].mxu0
        %v1072 = vadd.f32 0.0, %v1071
        %v1073 = vpop.f32.mrb[0].mxu0
        %v1074 = vpop.f32.mrb[0].mxu0
        %v1075 = vadd.f32 0.0, %v1074
        %v1076 = vpop.f32.mrb[0].mxu0
        %1077 = vmatprep.mubr.bf16.mxu0 0
        %1078 = vmatmul.mubr.bf16.gmra.mrb[0].mxu0 %v814
        %v1079 = vpop.f32.mrb[0].mxu0
        %v1080 = vadd.f32 0.0, %v1079
        %v1081 = vpop.f32.mrb[0].mxu0
        %v1082 = vpop.f32.mrb[0].mxu0
        %v1083 = vadd.f32 0.0, %v1082
        %v1084 = vpop.f32.mrb[0].mxu0
        %1085 = vmatprep.mubr.bf16.mxu0 0
        %1086 = vmatmul.mubr.bf16.gmra.mrb[0].mxu0 %v817
        %v1087 = vpop.f32.mrb[0].mxu0
        %v1088 = vadd.f32 0.0, %v1087
        %v1089 = vpop.f32.mrb[0].mxu0
        %v1090 = vpop.f32.mrb[0].mxu0
        %v1091 = vadd.f32 0.0, %v1090
        %v1092 = vpop.f32.mrb[0].mxu0
        %1093 = vmatprep.mubr.bf16.mxu0 0
        %1094 = vmatmul.mubr.bf16.gmra.mrb[0].mxu0 %v820
        %v1095 = vpop.f32.mrb[0].mxu0
        %v1096 = vadd.f32 0.0, %v1095
        %v1097 = vpop.f32.mrb[0].mxu0
        %v1098 = vpop.f32.mrb[0].mxu0
        %v1099 = vadd.f32 0.0, %v1098
        %v1100 = vpop.f32.mrb[0].mxu0
        %1101 = vmatprep.mubr.bf16.mxu0 0
        %1102 = vmatmul.mubr.bf16.gmra.mrb[0].mxu0 %v823
        %v1103 = vpop.f32.mrb[0].mxu0
        %v1104 = vadd.f32 0.0, %v1103
        %v1105 = vpop.f32.mrb[0].mxu0
        %v1106 = vpop.f32.mrb[0].mxu0
        %v1107 = vadd.f32 0.0, %v1106
        %v1108 = vpop.f32.mrb[0].mxu0
        %1109 = vmatprep.mubr.bf16.mxu0 0
        %1110 = vmatmul.mubr.bf16.gmra.mrb[0].mxu0 %v826
        %v1111 = vpop.f32.mrb[0].mxu0
        %v1112 = vadd.f32 0.0, %v1111
        %v1113 = vpop.f32.mrb[0].mxu0
        %v1114 = vpop.f32.mrb[0].mxu0
        %v1115 = vadd.f32 0.0, %v1114
        %v1116 = vpop.f32.mrb[0].mxu0
        %1117 = vmatprep.mubr.bf16.mxu0 0
        %1118 = vmatmul.mubr.bf16.gmra.mrb[0].mxu0 %v829
        %v1119 = vpop.f32.mrb[0].mxu0
        %v1120 = vadd.f32 0.0, %v1119
        %v1121 = vpop.f32.mrb[0].mxu0
        %v1122 = vpop.f32.mrb[0].mxu0
        %v1123 = vadd.f32 0.0, %v1122
        %v1124 = vpop.f32.mrb[0].mxu0
        %1125 = vmatprep.mubr.bf16.mxu0 0
        %1126 = vmatmul.mubr.bf16.gmra.mrb[0].mxu0 %v832
        %v1127 = vpop.f32.mrb[0].mxu0
        %v1128 = vadd.f32 0.0, %v1127
        %v1129 = vpop.f32.mrb[0].mxu0
        %v1130 = vpop.f32.mrb[0].mxu0
        %v1131 = vadd.f32 0.0, %v1130
        %v1132 = vpop.f32.mrb[0].mxu0
        %1133 = vmatprep.mubr.bf16.mxu0 0
        %1134 = vmatmul.mubr.bf16.gmra.mrb[0].mxu0 %v835
        %v1135 = vpop.f32.mrb[0].mxu0
        %v1136 = vadd.f32 0.0, %v1135
        %v1137 = vpop.f32.mrb[0].mxu0
        %v1138 = vpop.f32.mrb[0].mxu0
        %v1139 = vadd.f32 0.0, %v1138
        %v1140 = vpop.f32.mrb[0].mxu0
        %1141 = vmatprep.mubr.bf16.mxu0 0
        %1142 = vmatmul.mubr.bf16.gmra.mrb[0].mxu0 %v838
        %v1143 = vpop.f32.mrb[0].mxu0
        %v1144 = vadd.f32 0.0, %v1143
        %v1145 = vpop.f32.mrb[0].mxu0
        %v1146 = vpop.f32.mrb[0].mxu0
        %v1147 = vadd.f32 0.0, %v1146
        %v1148 = vpop.f32.mrb[0].mxu0
        %1149 = vmatprep.mubr.bf16.mxu0 0
        %1150 = vmatmul.mubr.bf16.gmra.mrb[0].mxu0 %v841
        %v1151 = vpop.f32.mrb[0].mxu0
        %v1152 = vadd.f32 0.0, %v1151
        %v1153 = vpop.f32.mrb[0].mxu0
        %v1154 = vpop.f32.mrb[0].mxu0
        %v1155 = vadd.f32 0.0, %v1154
        %v1156 = vpop.f32.mrb[0].mxu0
        %1157 = vmatprep.mubr.bf16.mxu0 0
        %1158 = vmatmul.mubr.bf16.gmra.mrb[0].mxu0 %v844
        %v1159 = vpop.f32.mrb[0].mxu0
        %v1160 = vadd.f32 0.0, %v1159
        %v1161 = vpop.f32.mrb[0].mxu0
        %v1162 = vpop.f32.mrb[0].mxu0
        %v1163 = vadd.f32 0.0, %v1162
        %v1164 = vpop.f32.mrb[0].mxu0
        %1165 = vmatprep.mubr.bf16.mxu0 0
        %1166 = vmatmul.mubr.bf16.gmra.mrb[0].mxu0 %v847
        %v1167 = vpop.f32.mrb[0].mxu0
        %v1168 = vadd.f32 0.0, %v1167
        %v1169 = vpop.f32.mrb[0].mxu0
        %v1170 = vpop.f32.mrb[0].mxu0
        %v1171 = vadd.f32 0.0, %v1170
        %v1172 = vpop.f32.mrb[0].mxu0
        %1173 = vmatprep.mubr.bf16.mxu0 0
        %1174 = vmatmul.mubr.bf16.gmra.mrb[0].mxu0 %v850
        %v1175 = vpop.f32.mrb[0].mxu0
        %v1176 = vadd.f32 0.0, %v1175
        %v1177 = vpop.f32.mrb[0].mxu0
        %v1178 = vpop.f32.mrb[0].mxu0
        %v1179 = vadd.f32 0.0, %v1178
        %v1180 = vpop.f32.mrb[0].mxu0
        %1181 = vdwg.mxu0
        %v1182 = vld [vmem:[#allocation7] sm:$0xff]
        %v1183 = vld [vmem:[#allocation7 + $0x8] sm:$0xff]
        %v1184 = vsub.f32 %v887, %v1064
        %v1185 = vsub.f32 %v890, %v1067
        %v1186 = vsub.f32 %v903, %v1080
        %v1187 = vsub.f32 %v906, %v1083
        %v1188 = vsub.f32 %v919, %v1096
        %v1189 = vsub.f32 %v922, %v1099
        %v1190 = vsub.f32 %v935, %v1112
        %v1191 = vsub.f32 %v938, %v1115
        %v1192 = vadd.f32 %v895, %v1056
        %v1193 = vadd.f32 %v898, %v1059
        %v1194 = vadd.f32 %v911, %v1072
        %v1195 = vadd.f32 %v914, %v1075
        %v1196 = vadd.f32 %v927, %v1088
        %v1197 = vadd.f32 %v930, %v1091
        %v1198 = vadd.f32 %v943, %v1104
        %v1199 = vadd.f32 %v946, %v1107
        %v1200 = vmul.f32 %v1184, %v1184
        %v1201 = vmul.f32 %v1185, %v1185
        %v1202 = vmul.f32 %v1186, %v1186
        %v1203 = vmul.f32 %v1187, %v1187
        %v1204 = vmul.f32 %v1188, %v1188
        %v1205 = vmul.f32 %v1189, %v1189
        %v1206 = vmul.f32 %v1190, %v1190
        %v1207 = vmul.f32 %v1191, %v1191
        %v1208 = vmul.f32 %v1192, %v1192
        %v1209 = vmul.f32 %v1193, %v1193
        %v1210 = vmul.f32 %v1194, %v1194
        %v1211 = vmul.f32 %v1195, %v1195
        %v1212 = vmul.f32 %v1196, %v1196
        %v1213 = vmul.f32 %v1197, %v1197
        %v1214 = vmul.f32 %v1198, %v1198
        %v1215 = vmul.f32 %v1199, %v1199
        %v1216 = vadd.f32 %v1200, %v1208
        %v1217 = vadd.f32 %v1201, %v1209
        %v1218 = vadd.f32 %v1202, %v1210
        %v1219 = vadd.f32 %v1203, %v1211
        %v1220 = vadd.f32 %v1204, %v1212
        %v1221 = vadd.f32 %v1205, %v1213
        %v1222 = vadd.f32 %v1206, %v1214
        %v1223 = vadd.f32 %v1207, %v1215
        %v1224 = vmul.f32 %v1216, %v1182
        %v1225 = vmul.f32 %v1217, %v1183
        %v1226 = vmul.f32 %v1218, %v1182
        %v1227 = vmul.f32 %v1219, %v1183
        %v1228 = vmul.f32 %v1220, %v1182
        %v1229 = vmul.f32 %v1221, %v1183
        %v1230 = vmul.f32 %v1222, %v1182
        %v1231 = vmul.f32 %v1223, %v1183
        %v1232 = vsel %vm402, %v1224, 0.0
        %v1233 = vsel %vm402, %v1225, 0.0
        %v1234 = vadd.f32 %v1232, %v1233
        %v1235 = vsel %vm402, %v1226, 0.0
        %v1236 = vadd.f32 %v1234, %v1235
        %v1237 = vsel %vm402, %v1227, 0.0
        %v1238 = vadd.f32 %v1236, %v1237
        %v1239 = vsel %vm402, %v1228, 0.0
        %v1240 = vadd.f32 %v1238, %v1239
        %v1241 = vsel %vm402, %v1229, 0.0
        %v1242 = vadd.f32 %v1240, %v1241
        %v1243 = vsel %vm402, %v1230, 0.0
        %v1244 = vadd.f32 %v1242, %v1243
        %v1245 = vsel %vm402, %v1231, 0.0
        %v1246 = vadd.f32 %v1244, %v1245
        %1247 = vadd.xlane.f32.xlu0 %v1246
        %v1248 = vpop.xlane.xlu0 %1247
        %v1249 = vrot.slane %v1248, 4
        %v1250 = vadd.f32 %v1248, %v1249
        %v1251 = vrot.slane %v1250, 2
        %v1252 = vadd.f32 %v1250, %v1251
        %v1253 = vrot.slane %v1252, 1
        %v1254 = vadd.f32 %v1252, %v1253
        %v1255 = vsub.f32 %v951, %v1128
        %v1256 = vsub.f32 %v954, %v1131
        %v1257 = vsub.f32 %v967, %v1144
        %v1258 = vsub.f32 %v970, %v1147
        %v1259 = vsub.f32 %v983, %v1160
        %v1260 = vsub.f32 %v986, %v1163
        %v1261 = vsub.f32 %v999, %v1176
        %v1262 = vsub.f32 %v1002, %v1179
        %v1263 = vadd.f32 %v959, %v1120
        %v1264 = vadd.f32 %v962, %v1123
        %v1265 = vadd.f32 %v975, %v1136
        %v1266 = vadd.f32 %v978, %v1139
        %v1267 = vadd.f32 %v991, %v1152
        %v1268 = vadd.f32 %v994, %v1155
        %v1269 = vadd.f32 %v1007, %v1168
        %v1270 = vadd.f32 %v1010, %v1171
        %v1271 = vmul.f32 %v1255, %v1255
        %v1272 = vmul.f32 %v1256, %v1256
        %v1273 = vmul.f32 %v1257, %v1257
        %v1274 = vmul.f32 %v1258, %v1258
        %v1275 = vmul.f32 %v1259, %v1259
        %v1276 = vmul.f32 %v1260, %v1260
        %v1277 = vmul.f32 %v1261, %v1261
        %v1278 = vmul.f32 %v1262, %v1262
        %v1279 = vmul.f32 %v1263, %v1263
        %v1280 = vmul.f32 %v1264, %v1264
        %v1281 = vmul.f32 %v1265, %v1265
        %v1282 = vmul.f32 %v1266, %v1266
        %v1283 = vmul.f32 %v1267, %v1267
        %v1284 = vmul.f32 %v1268, %v1268
        %v1285 = vmul.f32 %v1269, %v1269
        %v1286 = vmul.f32 %v1270, %v1270
        %v1287 = vadd.f32 %v1271, %v1279
        %v1288 = vadd.f32 %v1272, %v1280
        %v1289 = vadd.f32 %v1273, %v1281
        %v1290 = vadd.f32 %v1274, %v1282
        %v1291 = vadd.f32 %v1275, %v1283
        %v1292 = vadd.f32 %v1276, %v1284
        %v1293 = vadd.f32 %v1277, %v1285
        %v1294 = vadd.f32 %v1278, %v1286
        %v1295 = vmul.f32 %v1287, %v1182
        %v1296 = vmul.f32 %v1288, %v1183
        %v1297 = vmul.f32 %v1289, %v1182
        %v1298 = vmul.f32 %v1290, %v1183
        %v1299 = vmul.f32 %v1291, %v1182
        %v1300 = vmul.f32 %v1292, %v1183
        %v1301 = vmul.f32 %v1293, %v1182
        %v1302 = vmul.f32 %v1294, %v1183
        %v1303 = vsel %vm402, %v1295, 0.0
        %v1304 = vsel %vm402, %v1296, 0.0
        %v1305 = vadd.f32 %v1303, %v1304
        %v1306 = vsel %vm402, %v1297, 0.0
        %v1307 = vadd.f32 %v1305, %v1306
        %v1308 = vsel %vm402, %v1298, 0.0
        %v1309 = vadd.f32 %v1307, %v1308
        %v1310 = vsel %vm402, %v1299, 0.0
        %v1311 = vadd.f32 %v1309, %v1310
        %v1312 = vsel %vm402, %v1300, 0.0
        %v1313 = vadd.f32 %v1311, %v1312
        %v1314 = vsel %vm402, %v1301, 0.0
        %v1315 = vadd.f32 %v1313, %v1314
        %v1316 = vsel %vm402, %v1302, 0.0
        %v1317 = vadd.f32 %v1315, %v1316
        %1318 = vadd.xlane.f32.xlu0 %v1317
        %v1319 = vpop.xlane.xlu0 %1318
        %v1320 = vrot.slane %v1319, 4
        %v1321 = vadd.f32 %v1319, %v1320
        %v1322 = vrot.slane %v1321, 2
        %v1323 = vadd.f32 %v1321, %v1322
        %v1324 = vrot.slane %v1323, 1
        %v1325 = vadd.f32 %v1323, %v1324
        %v1326 = vrsqrt.pop %v1254
        %v1327 = vmul.f32 %v1254, %v1326
        %vm1328 = vcmp.eq.f32.partialorder %v1254, inf
        %v1329 = vsel %vm1328, %v1254, %v1327
        %vm1330 = vcmp.eq.f32.partialorder %v1254, 0.0
        %v1331 = vand.u32 %v1254, 2147483648
        %v1332 = vsel %vm1330, %v1331, %v1329
        %v1333 = vrsqrt.pop %v1325
        %v1334 = vmul.f32 %v1332, %v1333
        %vm1335 = vcmask 0
        %1336 = vst.msk [vmem:[%s360] sm:$0x1] %vm1335, %v1334
        %p1337 = scmp.lt.s32.totalorder %s20, 1
        %s1338 = scalar_select %p1337, %s20, 1
        %s1339 = scalar_lea.vmem %s6, %s1338
        // Predicated region
        $region69: #{tpu_custom_call.1} parent=43 // pred_check
          %p1340 = pneg %p174
        $region70: #{tpu_custom_call.1} parent=43 // pred_check_branch
          %1342 = sbr.rel (%p1340) target = $region72
        $region71: #{tpu_custom_call.1} parent=43 // pred_region
          _
        $region72: #{tpu_custom_call.1} parent=43 // pred_fallthru
          _
      $region44: #{tpu_custom_call.1} parent=5 // pred_fallthru
        _
      %p1343 = scmp.le.s32.totalorder 2, %s15
      // Predicated region
      $region73: #{tpu_custom_call.1} parent=5 // pred_check
        %p1344 = pneg %p1343
      $region74: #{tpu_custom_call.1} parent=5 // pred_check_branch
        %1346 = sbr.rel (%p1344) target = $region76
      $region75: #{tpu_custom_call.1} parent=5 // pred_region
        %s1347 = ssub.s32 %s15, 2
        // Predicated region
        $region77: #{tpu_custom_call.1} parent=75 // pred_check
          %p1348 = pneg %p180
        $region78: #{tpu_custom_call.1} parent=75 // pred_check_branch
          %1350 = sbr.rel (%p1348) target = $region80
        $region79: #{tpu_custom_call.1} parent=75 // pred_region
          %p1351 = scmp.lt.s32.totalorder %s21, 1
          %s1352 = scalar_select %p1351, %s21, 1
          %s1353 = scalar_lea.vmem %s6, %s1352
        $region80: #{tpu_custom_call.1} parent=75 // pred_fallthru
          _
      $region76: #{tpu_custom_call.1} parent=5 // pred_fallthru
        _
    $region6: #{tpu_custom_call.1} parent=1 // loop_footer
      %s19 = sadd.s32 1, %s15
    $region7: #{tpu_custom_call.1} parent=1 // loop_footer_branch
      %14 = sbr.rel target = $region3
    $region8: #{tpu_custom_call.1} parent=1 // loop_exit
      _
    %1354 = vsyncpa [#allocation3], 1
    %s1355 = scalar_lea.sflag [#allocation3], 1
    %1356 = vsyncpa %s1355, 1
    %1357 = vsyncpa [#allocation5], 1
    %1358 = vsyncpa [#allocation8], 1

</llo_original>
